<compile_context>
chip_gen: v7x
topology: tpu7x:2x2x1
jax: 0.10.0
libtpu: 0.0.40
codegen_flags: <defaults>
</compile_context>

<pallas_src>
import jax
import jax.numpy as jnp
from jax import lax
from jax.experimental import pallas as pl
from jax.experimental.pallas import tpu as pltpu


# Exact-f32 MXU contractions: energy errors are amplified by exp(), and the
# apply matmul margin vs the f32 reference is thin, so keep both at HIGHEST.
_MXU_PRECISION = lax.Precision.HIGHEST


# ----------------------------------------------------------------------------
# Kernels
# ----------------------------------------------------------------------------
def cam_energy_softmax_kernel(x_ref, att_ref, acc_ref):
    """Pass 1: accumulate channel-channel energy over N tiles; softmax at end.

    x_ref  : (1, C, Tn) block of x.view(B, C, N)
    att_ref: (1, C, C)  attention output (written once, on the last N tile)
    acc_ref: (C, C) f32 scratch accumulator (persists across the N-tile axis)
    """
    nt = pl.program_id(1)

    @pl.when(nt == 0)
    def _init():
        acc_ref[...] = jnp.zeros_like(acc_ref)

    x = x_ref[0]  # (C, Tn)
    # energy += x @ x^T : NT dot_general contracts the lane dim of both
    # operands directly (no transposed (C, Tn) copy is materialized).
    acc_ref[...] += lax.dot_general(
        x, x, (((1,), (1,)), ((), ())),
        preferred_element_type=jnp.float32,
        precision=_MXU_PRECISION)

    @pl.when(nt == pl.num_programs(1) - 1)
    def _finalize():
        e = acc_ref[...]                                         # (C, C)
        # softmax(rowmax(e) - e) == exp(rowmin(e) - e) / rowsum(...):
        # a single row-reduce + subtract, numerically stable (max exp arg = 0).
        p = jnp.exp(jnp.min(e, axis=-1, keepdims=True) - e)
        att_ref[0] = (p / jnp.sum(p, axis=-1, keepdims=True)).astype(att_ref.dtype)


def cam_apply_kernel(gamma_ref, att_ref, x_ref, out_ref):
    """Pass 2: out_tile = gamma * (attention @ x_tile) + x_tile (fused residual).

    gamma_ref: (1,) f32 scalar in SMEM
    att_ref  : (1, C, C)
    x_ref    : (1, C, Tn)
    out_ref  : (1, C, Tn)
    """
    x = x_ref[0]                                                 # (C, Tn)
    o = jnp.dot(att_ref[0], x, preferred_element_type=jnp.float32,
                precision=_MXU_PRECISION)
    out_ref[0] = (gamma_ref[0] * o + x).astype(out_ref.dtype)


def cam_fused_kernel(gamma_ref, x_ref, out_ref):
    """Single-pass kernel (used when a whole (C, N) slab fits VMEM).

    gamma_ref: (1,) f32 scalar in SMEM
    x_ref    : (1, C, N)
    out_ref  : (1, C, N)
    """
    x = x_ref[0].astype(jnp.float32)                             # (C, N)
    energy = lax.dot_general(
        x, x, (((1,), (1,)), ((), ())),
        preferred_element_type=jnp.float32,
        precision=_MXU_PRECISION)                                # (C, C)
    p = jnp.exp(jnp.min(energy, axis=-1, keepdims=True) - energy)
    att = p / jnp.sum(p, axis=-1, keepdims=True)
    o = jnp.dot(att, x, preferred_element_type=jnp.float32,
                precision=_MXU_PRECISION)                        # (C, N)
    out_ref[0] = (gamma_ref[0] * o + x_ref[0]).astype(out_ref.dtype)


# ----------------------------------------------------------------------------
# VMEM budgeting / tiling helpers
# ----------------------------------------------------------------------------
def _vmem_capacity_bytes():
    try:
        return int(pltpu.get_tpu_info().vmem_capacity_bytes)
    except Exception:
        return 64 << 20  # conservative: v7x per-TensorCore VMEM


def _vmem_budget_bytes(cap):
    # Keep resident pipeline buffers well under physical capacity so the
    # compiler has headroom for temporaries (larger on v5e/v6e's 128 MiB).
    return min(int(cap * 0.45), 48 << 20)


def _fused_resident_bytes(C, N):
    # x block + out block double-buffered, plus ~3 (C, C) f32 temporaries.
    return 4 * C * N * 4 + 3 * C * C * 4


def _pick_tile_n(N, C, budget):
    def pass2_resident(tn):
        # double-buffered x-in + out blocks, plus double-buffered attention.
        return 4 * C * tn * 4 + 2 * C * C * 4
    for cand in (2048, 1024, 512, 256, 128):       # lane-aligned, largest first
        if N % cand == 0 and pass2_resident(cand) <= budget:
            return cand
    # Ragged N (H*W not a multiple of 128): fall back to one full-axis block.
    return N


def _cparams(dim_sem, resident_bytes, cap):
    limit = max(2 * resident_bytes, 32 << 20)      # headroom for temporaries
    limit = min(limit, cap - (8 << 20))            # never exceed physical VMEM
    return pltpu.CompilerParams(dimension_semantics=dim_sem,
                                vmem_limit_bytes=int(limit))


# ----------------------------------------------------------------------------
# Forward wrapper
# ----------------------------------------------------------------------------
def _two_pass_forward(xf, gamma_arr, tile_n, cap, budget):
    B, C, N = xf.shape
    if tile_n is None:
        tile_n = _pick_tile_n(N, C, budget)
    assert N % tile_n == 0, "tile_n must divide N = H*W"
    n_tiles = N // tile_n

    # ---- Pass 1: energy accumulation over N tiles + in-kernel softmax -------
    pass1_resident = 2 * C * tile_n * 4 + 3 * C * C * 4
    attention = pl.pallas_call(
        cam_energy_softmax_kernel,
        out_shape=jax.ShapeDtypeStruct((B, C, C), jnp.float32),
        grid_spec=pltpu.PrefetchScalarGridSpec(
            num_scalar_prefetch=0,
            grid=(B, n_tiles),
            in_specs=[
                pl.BlockSpec((1, C, tile_n), lambda b, n: (b, 0, n)),  # x tiles
            ],
            out_specs=pl.BlockSpec((1, C, C), lambda b, n: (b, 0, 0)),
            scratch_shapes=[pltpu.VMEM((C, C), jnp.float32)],
        ),
        compiler_params=_cparams(("parallel", "arbitrary"), pass1_resident, cap),
    )(xf)

    # ---- Pass 2: out = gamma * (attention @ x) + x, streamed over N tiles ---
    pass2_resident = 4 * C * tile_n * 4 + 2 * C * C * 4
    out = pl.pallas_call(
        cam_apply_kernel,
        out_shape=jax.ShapeDtypeStruct((B, C, N), xf.dtype),
        grid_spec=pltpu.PrefetchScalarGridSpec(
            num_scalar_prefetch=0,
            grid=(B, n_tiles),
            in_specs=[
                pl.BlockSpec(memory_space=pltpu.MemorySpace.SMEM),        # gamma
                pl.BlockSpec((1, C, C), lambda b, n: (b, 0, 0)),          # attn
                pl.BlockSpec((1, C, tile_n), lambda b, n: (b, 0, n)),     # x
            ],
            out_specs=pl.BlockSpec((1, C, tile_n), lambda b, n: (b, 0, n)),
        ),
        compiler_params=_cparams(("parallel", "parallel"), pass2_resident, cap),
    )(gamma_arr, attention, xf)
    return out


def _fused_forward(xf, gamma_arr, cap, budget):
    B, C, N = xf.shape
    resident = _fused_resident_bytes(C, N)
    return pl.pallas_call(
        cam_fused_kernel,
        out_shape=jax.ShapeDtypeStruct((B, C, N), xf.dtype),
        grid_spec=pltpu.PrefetchScalarGridSpec(
            num_scalar_prefetch=0,
            grid=(B,),
            in_specs=[
                pl.BlockSpec(memory_space=pltpu.MemorySpace.SMEM),        # gamma
                pl.BlockSpec((1, C, N), lambda b: (b, 0, 0)),             # x
            ],
            out_specs=pl.BlockSpec((1, C, N), lambda b: (b, 0, 0)),
        ),
        compiler_params=_cparams(("parallel",), resident, cap),
    )(gamma_arr, xf)


def cam_forward(x, gamma, *, tile_n=None, force_two_pass=False):
    """CAM_Module forward. x: (B, C, H, W) float32, gamma: scalar parameter."""
    B, C, H, W = x.shape
    N = H * W
    xf = x.reshape(B, C, N)                         # metadata-only reshape
    gamma_arr = jnp.asarray(gamma, dtype=jnp.float32).reshape(1)

    cap = _vmem_capacity_bytes()
    budget = _vmem_budget_bytes(cap)

    if (not force_two_pass and tile_n is None
            and _fused_resident_bytes(C, N) <= budget):
        out = _fused_forward(xf, gamma_arr, cap, budget)
    else:
        out = _two_pass_forward(xf, gamma_arr, tile_n, cap, budget)
    return out.reshape(B, C, H, W)


# ----------------------------------------------------------------------------
# Pure-JAX reference of the PyTorch CAM_Module forward
# ----------------------------------------------------------------------------
def _reference_forward(x, gamma):
    B, C, H, W = x.shape
    xf = x.reshape(B, C, H * W)
    energy = jnp.einsum("bcn,bdn->bcd", xf, xf,
                        precision=lax.Precision.HIGHEST)
    energy_new = jnp.max(energy, axis=-1, keepdims=True) - energy
    att = jax.nn.softmax(energy_new, axis=-1)
    out = jnp.einsum("bcd,bdn->bcn", att, xf,
                     precision=lax.Precision.HIGHEST)
    return gamma * out.reshape(B, C, H, W) + x


if __name__ == "__main__":
    B, C, H, W = 2, 32, 16, 16   # N = 256 spatial positions

    key = jax.random.PRNGKey(0)
    x = 0.5 * jax.random.normal(key, (B, C, H, W), dtype=jnp.float32)

    # gamma is an nn.Parameter initialized to 0 in the module; use a nonzero
    # value so the attention path is actually exercised.
    gamma = jnp.float32(0.5)

    ref = _reference_forward(x, gamma)

    # Fused single-pass path (auto-selected at this size).
    out_fused = jax.block_until_ready(cam_forward(x, gamma))
    assert out_fused.shape == (B, C, H, W)
    assert jnp.allclose(out_fused, ref, atol=1e-3, rtol=1e-3), \
        "fused path mismatch vs reference"

    # Streaming two-pass path with two N tiles (exercises cross-tile energy
    # accumulation, the finalize softmax, and the fused gamma+residual apply).
    out_stream = jax.block_until_ready(
        cam_forward(x, gamma, tile_n=128, force_two_pass=True))
    assert out_stream.shape == (B, C, H, W)
    assert jnp.allclose(out_stream, ref, atol=1e-3, rtol=1e-3), \
        "two-pass path mismatch vs reference"

    print("KERNEL_OK")
</pallas_src>

<mosaic_0001>
module attributes {stable_mosaic.version = 11 : i64} {
  func.func @cam_fused_kernel(%arg0: i32, %arg1: memref<1xf32, #tpu.memory_space<smem>>, %arg2: memref<1x32x256xf32, #tpu.memory_space<vmem>>, %arg3: memref<1x32x256xf32, #tpu.memory_space<vmem>>) attributes {dimension_semantics = [#tpu.dimension_semantics<parallel>], iteration_bounds = array<i64: 2>, scalar_prefetch = 0 : i64, scratch_operands = 0 : i64, tpu.core_type = #tpu.core_type<tc>, window_params = [{transform_indices = @transform_0, window_bounds = array<i64: 1>}, {transform_indices = @transform_1, window_bounds = array<i64: 1, 32, 256>}, {transform_indices = @transform_2, window_bounds = array<i64: 1, 32, 256>}]} {
    %c0 = arith.constant 0 : index
    %c0_0 = arith.constant 0 : index
    %c0_1 = arith.constant 0 : index
    %0 = vector.load %arg2[%c0, %c0_0, %c0_1] : memref<1x32x256xf32, #tpu.memory_space<vmem>>, vector<1x32x256xf32>
    %1 = vector.shape_cast %0 : vector<1x32x256xf32> to vector<32x256xf32>
    %cst = arith.constant dense<0.000000e+00> : vector<32x32xf32>
    %2 = tpu.matmul %1, %1, %cst {dimension_numbers = #tpu.dot_dimension_numbers<[1], [1], [0], [0], [0, 0, 1, 0], [], []>, precision = #tpu.contract_precision<fp32>} : vector<32x256xf32>, vector<32x256xf32>, vector<32x32xf32> -> vector<32x32xf32>
    %cst_2 = arith.constant dense<0x7F800000> : vector<32xf32>
    %3 = vector.multi_reduction <minimumf>, %2, %cst_2 [1] : vector<32x32xf32> to vector<32xf32>
    %4 = vector.shape_cast %3 : vector<32xf32> to vector<32x1xf32>
    %5 = vector.broadcast %4 : vector<32x1xf32> to vector<32x32xf32>
    %6 = arith.subf %5, %2 : vector<32x32xf32>
    %7 = math.exp %6 : vector<32x32xf32>
    %cst_3 = arith.constant dense<0.000000e+00> : vector<32xf32>
    %8 = vector.multi_reduction <add>, %7, %cst_3 [1] : vector<32x32xf32> to vector<32xf32>
    %9 = vector.shape_cast %8 : vector<32xf32> to vector<32x1xf32>
    %10 = vector.broadcast %9 : vector<32x1xf32> to vector<32x32xf32>
    %11 = arith.divf %7, %10 : vector<32x32xf32>
    %cst_4 = arith.constant dense<0.000000e+00> : vector<32x256xf32>
    %12 = tpu.matmul %11, %1, %cst_4 {dimension_numbers = #tpu.dot_dimension_numbers<[1], [0], [0], [1], [0, 0, 1, 1], [], []>, precision = #tpu.contract_precision<fp32>} : vector<32x32xf32>, vector<32x256xf32>, vector<32x256xf32> -> vector<32x256xf32>
    %c0_5 = arith.constant 0 : index
    %13 = memref.load %arg1[%c0_5] : memref<1xf32, #tpu.memory_space<smem>>
    %14 = vector.broadcast %13 : f32 to vector<32x256xf32>
    %15 = arith.mulf %14, %12 : vector<32x256xf32>
    %c0_6 = arith.constant 0 : index
    %c0_7 = arith.constant 0 : index
    %c0_8 = arith.constant 0 : index
    %16 = vector.load %arg2[%c0_6, %c0_7, %c0_8] : memref<1x32x256xf32, #tpu.memory_space<vmem>>, vector<1x32x256xf32>
    %17 = vector.shape_cast %16 : vector<1x32x256xf32> to vector<32x256xf32>
    %18 = arith.addf %15, %17 : vector<32x256xf32>
    %c0_9 = arith.constant 0 : index
    %c0_10 = arith.constant 0 : index
    %c0_11 = arith.constant 0 : index
    %19 = vector.load %arg3[%c0_9, %c0_10, %c0_11] : memref<1x32x256xf32, #tpu.memory_space<vmem>>, vector<1x32x256xf32>
    %20 = vector.shape_cast %19 : vector<1x32x256xf32> to vector<32x256xf32>
    %21 = vector.shape_cast %18 : vector<32x256xf32> to vector<1x32x256xf32>
    tpu.vector_store %arg3[%c0_9, %c0_10, %c0_11], %21 {strides = array<i32>} : memref<1x32x256xf32, #tpu.memory_space<vmem>>, vector<1x32x256xf32>,
    return
  }
  func.func @transform_0(%arg0: i32) -> i32 {
    %c0_i32 = arith.constant 0 : i32
    %c0_i32_0 = arith.constant 0 : i32
    return %c0_i32 : i32
  }
  func.func @transform_1(%arg0: i32) -> (i32, i32, i32) {
    %c0_i32 = arith.constant 0 : i32
    %c0_i32_0 = arith.constant 0 : i32
    %c0_i32_1 = arith.constant 0 : i32
    return %arg0, %c0_i32, %c0_i32_0 : i32, i32, i32
  }
  func.func @transform_2(%arg0: i32) -> (i32, i32, i32) {
    %c0_i32 = arith.constant 0 : i32
    %c0_i32_0 = arith.constant 0 : i32
    %c0_i32_1 = arith.constant 0 : i32
    return %arg0, %c0_i32, %c0_i32_0 : i32, i32, i32
  }
}

</mosaic_0001>

<llo_original>
// kernel: tpu_custom_call.1
$region0: #{tpu_custom_call.1}
  #allocation0 [shape = 'u32[]', space=smem, size = 0x4, offset = 0x4, fixed_abs, tag = 'smem constant byte address 0x4 - core index']
  #allocation1 [shape = 'u32[144,128]{1,0:T(1,128)}', space=vmem, size = 0x12000, scoped, tag = 'internal scratch']
  #allocation2 [shape = 'f32[1]{0:T(128)S(6)}', space=smem, size = 0x200, scoped, tag = 'scoped memory for tpu_custom_call.1']
  %s0 = inlined_call_operand.<no memory space> [shape: f32[1], index: 0, kind: input, shape index: {}]
  %s1 = inlined_call_operand.hbm [shape: f32[2,32,256], index: 1, kind: input, shape index: {}]
  %s2 = inlined_call_operand.hbm [shape: f32[2,32,256], index: 2, kind: output, shape index: {}]
  %s3 = sld [smem:[#allocation0]]
  $region45: #{tpu_custom_call.1} parent=0
    _
  %s5 = ssub.s32 1, %s3
  %s6 = scalar_select 0, %s5, %s3
  %7 = sst [smem:[#allocation2]] %s0
  $region1: #{tpu_custom_call.1} parent=0
    #allocation3 [shape = 'u8[65536]{0}', space=vmem, size = 0x10000, scoped, tag = 'input window, operand 1']
    #allocation4 [shape = 's32[2]{0}', space=sflag, size = 0x8, scoped, tag = 'scoped memory for tpu_custom_call.1']
    #allocation5 [shape = 's32[2]{0}', space=sflag, size = 0x8, scoped, tag = 'scoped memory for tpu_custom_call.1']
    #allocation6 [shape = 'u8[65536]{0}', space=vmem, size = 0x10000, scoped, tag = 'output window, operand 0']
    %8 = vsyncpa [#allocation4], 0
    %s9 = scalar_lea.sflag [#allocation4], 1
    %10 = vsyncpa %s9, 0
    %11 = vsyncpa [#allocation5], 0
    %s12 = scalar_lea.sflag [#allocation5], 1
    %13 = vsyncpa %s12, 0
    loop: start=0, step=1, limit=4
    $region2: #{tpu_custom_call.1} parent=1 // loop_pre_header
      _
    $region3: #{tpu_custom_call.1} parent=1 // loop_header
      %s15 = sphi 0, %s19
      %p16 = scmp.ge.s32.totalorder %s15, 4
      %s23 = sphi 0, %s23
      %s25 = sphi 0, %s23
      %s26 = sphi 0, %s25
      %s40 = sphi 0, %s26
      %s46 = sphi 0, %s48
      %s49 = sphi 0, %s46
      %s50 = sphi 0, %s49
      %s66 = sphi 0, %s50
      %s72 = sphi 0, %s74
      %s75 = sphi 0, %s72
      %s76 = sphi 0, %s75
      %s92 = sphi 0, %s76
    $region4: #{tpu_custom_call.1} parent=1 // loop_header_branch
      %18 = sbr.rel (%p16) target = $region8
    $region5: #{tpu_custom_call.1} parent=1 // loop_body
      %s20 = ssub.s32 %s15, 1
      %s21 = ssub.s32 %s15, 2
      %s22 = sadd.s32 %s15, 1
      %s24 = sadd.s32 %s23, 1
      %p27 = scmp.eq.s32.totalorder %s15, 1
      %p28 = scmp.ne.s32.totalorder %s23, %s25
      %p29 = scmp.eq.s32.totalorder %s15, 0
      %p30 = por %p28, %p29
      %p31 = scmp.ne.s32.totalorder %s23, %s25
      %p32 = scmp.eq.s32.totalorder %s20, 1
      %p33 = por %p31, %p32
      %p34 = scmp.ne.s32.totalorder %s25, %s26
      %p35 = scmp.eq.s32.totalorder %s20, 0
      %p36 = por %p34, %p35
      %p37 = scmp.ne.s32.totalorder %s25, %s26
      %p38 = scmp.eq.s32.totalorder %s21, 1
      %p39 = por %p37, %p38
      %p41 = scmp.ne.s32.totalorder %s26, %s40
      %p42 = scmp.eq.s32.totalorder %s21, 0
      %p43 = por %p41, %p42
      %s44 = ssub.s32 %s15, %s22
      %p45 = scmp.eq.s32.totalorder %s44, 0
      %s47 = sadd.s32 %s46, 1
      %s48 = scalar_select %p45, %s46, %s47
      %p51 = pneg %p45
      %p52 = scmp.eq.s32.totalorder %s15, 1
      %p53 = por %p51, %p52
      %p54 = scmp.ne.s32.totalorder %s46, %s49
      %p55 = scmp.eq.s32.totalorder %s15, 0
      %p56 = por %p54, %p55
      %p57 = scmp.ne.s32.totalorder %s46, %s49
      %p58 = scmp.eq.s32.totalorder %s20, 1
      %p59 = por %p57, %p58
      %p60 = scmp.ne.s32.totalorder %s49, %s50
      %p61 = scmp.eq.s32.totalorder %s20, 0
      %p62 = por %p60, %p61
      %p63 = scmp.ne.s32.totalorder %s49, %s50
      %p64 = scmp.eq.s32.totalorder %s21, 1
      %p65 = por %p63, %p64
      %p67 = scmp.ne.s32.totalorder %s50, %s66
      %p68 = scmp.eq.s32.totalorder %s21, 0
      %p69 = por %p67, %p68
      %s70 = ssub.s32 %s15, %s22
      %p71 = scmp.eq.s32.totalorder %s70, 0
      %s73 = sadd.s32 %s72, 1
      %s74 = scalar_select %p71, %s72, %s73
      %p77 = pneg %p71
      %p78 = scmp.eq.s32.totalorder %s15, 1
      %p79 = por %p77, %p78
      %p80 = scmp.ne.s32.totalorder %s72, %s75
      %p81 = scmp.eq.s32.totalorder %s15, 0
      %p82 = por %p80, %p81
      %p83 = scmp.ne.s32.totalorder %s72, %s75
      %p84 = scmp.eq.s32.totalorder %s20, 1
      %p85 = por %p83, %p84
      %p86 = scmp.ne.s32.totalorder %s75, %s76
      %p87 = scmp.eq.s32.totalorder %s20, 0
      %p88 = por %p86, %p87
      %p89 = scmp.ne.s32.totalorder %s75, %s76
      %p90 = scmp.eq.s32.totalorder %s21, 1
      %p91 = por %p89, %p90
      %p93 = scmp.ne.s32.totalorder %s76, %s92
      %p94 = scmp.eq.s32.totalorder %s21, 0
      %p95 = por %p93, %p94
      %p96 = scmp.le.s32.totalorder 1, %s15
      %p97 = scmp.lt.s32.totalorder %s15, 3
      %p98 = pnand %p96, %p97
      %p99 = pneg %p98
      // Predicated region
      $region9: #{tpu_custom_call.1} parent=5 // pred_check
        _
      $region10: #{tpu_custom_call.1} parent=5 // pred_check_branch
        %101 = sbr.rel (%p98) target = $region12
      $region11: #{tpu_custom_call.1} parent=5 // pred_region
        %s102 = ssub.s32 %s15, 1
        // Predicated region
        $region13: #{tpu_custom_call.1} parent=11 // pred_check
          %p103 = pneg %p36
        $region14: #{tpu_custom_call.1} parent=11 // pred_check_branch
          %105 = sbr.rel (%p103) target = $region16
        $region15: #{tpu_custom_call.1} parent=11 // pred_region
          _
        $region16: #{tpu_custom_call.1} parent=11 // pred_fallthru
          _
      $region12: #{tpu_custom_call.1} parent=5 // pred_fallthru
        _
      %p106 = scmp.lt.s32.totalorder %s15, 2
      // Predicated region
      $region17: #{tpu_custom_call.1} parent=5 // pred_check
        %p107 = pneg %p106
      $region18: #{tpu_custom_call.1} parent=5 // pred_check_branch
        %109 = sbr.rel (%p107) target = $region20
      $region19: #{tpu_custom_call.1} parent=5 // pred_region
        // Predicated region
        $region21: #{tpu_custom_call.1} parent=19 // pred_check
          %p110 = pneg %p56
        $region22: #{tpu_custom_call.1} parent=19 // pred_check_branch
          %112 = sbr.rel (%p110) target = $region24
        $region23: #{tpu_custom_call.1} parent=19 // pred_region
          %s113 = sand.u32 %s46, 1
          %s114 = scalar_lea.sflag [#allocation4], %s113
          %s115 = sand.u32 %s46, 1
          %s116 = smul.addr %s115, 64
          %s117 = scalar_lea.vmem [#allocation3], %s116
          %s119 = ssub.s32 1024, 1024
          %120 = vsyncadd %s114, %s119
          %s121 = smul.addr %s15, 8
          %s122 = smul.addr %s121, 128
          %s123 = scalar_lea.hbm %s1, %s122
          %s124 = sshll.u32 %s117, 4
          %s125 = int_to_ptr.vmem [resolvable:$true] %s124
          %130 = dma.hbm_to_vmem [thread:$0]  %s123, 1024, %s125, %s114, 256, 256, 16
        $region24: #{tpu_custom_call.1} parent=19 // pred_fallthru
          _
      $region20: #{tpu_custom_call.1} parent=5 // pred_fallthru
        _
      %p131 = scmp.le.s32.totalorder 1, %s15
      %p132 = scmp.lt.s32.totalorder %s15, 3
      %p133 = pnand %p131, %p132
      %p134 = pneg %p133
      // Predicated region
      $region25: #{tpu_custom_call.1} parent=5 // pred_check
        _
      $region26: #{tpu_custom_call.1} parent=5 // pred_check_branch
        %136 = sbr.rel (%p133) target = $region28
      $region27: #{tpu_custom_call.1} parent=5 // pred_region
        %s137 = ssub.s32 %s15, 1
        %s138 = sand.u32 %s49, 1
        %s139 = scalar_lea.sflag [#allocation4], %s138
        %s140 = sand.u32 %s49, 1
        %s141 = smul.addr %s140, 64
        %s142 = scalar_lea.vmem [#allocation3], %s141
        // Predicated region
        $region29: #{tpu_custom_call.1} parent=27 // pred_check
          %p143 = pneg %p62
        $region30: #{tpu_custom_call.1} parent=27 // pred_check_branch
          %145 = sbr.rel (%p143) target = $region32
        $region31: #{tpu_custom_call.1} parent=27 // pred_region
          %146 = dma.done %s139, 1024
        $region32: #{tpu_custom_call.1} parent=27 // pred_fallthru
          _
        %p147 = pneg %p36
        %p148 = pneg %p33
        %s149 = sand.u32 %s49, 1
        %s150 = scalar_lea.sflag [#allocation4], %s149
        %s151 = sand.u32 %s49, 1
        %s152 = smul.addr %s151, 64
        %s153 = scalar_lea.vmem [#allocation3], %s152
        %p154 = pneg %p62
        %p155 = pneg %p59
        %p156 = pneg %p88
        %p157 = pneg %p85
        %s158 = sand.u32 %s75, 1
        %s159 = scalar_lea.sflag [#allocation5], %s158
        %s160 = sand.u32 %s75, 1
        %s161 = smul.addr %s160, 64
        %s162 = scalar_lea.vmem [#allocation6], %s161
        %v163 = vld [vmem:[%s142] sm:$0xff]
        %v164 = vld [vmem:[%s142 + $0x8] sm:$0xff]
        %v165 = vld [vmem:[%s142 + $0x10] sm:$0xff]
        %v166 = vld [vmem:[%s142 + $0x18] sm:$0xff]
        %v167 = vld [vmem:[%s142 + $0x20] sm:$0xff]
        %v168 = vld [vmem:[%s142 + $0x28] sm:$0xff]
        %v169 = vld [vmem:[%s142 + $0x30] sm:$0xff]
        %v170 = vld [vmem:[%s142 + $0x38] sm:$0xff]
        %v171 = vand.u32 %v164, 4294901760
        %172 = vmatprep.subr.mxu0 %v171
        %v173 = vand.u32 %v163, 4294901760
        %174 = vmatpush1.xpose.msra.mxu0 %v173
        %v175 = vand.u32 %v166, 4294901760
        %176 = vmatprep.subr.mxu0 %v175
        %v177 = vand.u32 %v165, 4294901760
        %178 = vmatpush1.xpose.msra.mxu0 %v177
        %v179 = vand.u32 %v168, 4294901760
        %180 = vmatprep.subr.mxu0 %v179
        %v181 = vand.u32 %v167, 4294901760
        %182 = vmatpush1.xpose.msra.mxu0 %v181
        %v183 = vand.u32 %v170, 4294901760
        %184 = vmatprep.subr.mxu0 %v183
        %v185 = vand.u32 %v169, 4294901760
        %186 = vmatpush1.xpose.msra.mxu0 %v185
        %187 = vmatprep.subr.mxu0 0.0
        %188 = vmatpush1.xpose.msra.mxu0 0.0
        %189 = vmatprep.subr.mxu0 0.0
        %190 = vmatpush1.xpose.msra.mxu0 0.0
        %191 = vmatprep.subr.mxu0 0.0
        %192 = vmatpush1.xpose.msra.mxu0 0.0
        %193 = vmatprep.subr.mxu0 0.0
        %194 = vmatpush1.xpose.msra.mxu0 0.0
        %195 = vmatprep.subr.mxu0 0.0
        %196 = vmatpush1.xpose.msra.mxu0 0.0
        %197 = vmatprep.subr.mxu0 0.0
        %198 = vmatpush1.xpose.msra.mxu0 0.0
        %199 = vmatprep.subr.mxu0 0.0
        %200 = vmatpush1.xpose.msra.mxu0 0.0
        %201 = vmatprep.subr.mxu0 0.0
        %202 = vmatpush1.xpose.msra.mxu0 0.0
        %203 = vmatprep.subr.mxu0 0.0
        %204 = vmatpush1.xpose.msra.mxu0 0.0
        %205 = vmatprep.subr.mxu0 0.0
        %206 = vmatpush1.xpose.msra.mxu0 0.0
        %207 = vmatprep.subr.mxu0 0.0
        %208 = vmatpush1.xpose.msra.mxu0 0.0
        %209 = vmatprep.subr.mxu0 0.0
        %210 = vmatpush1.xpose.msra.mxu0 0.0
        %211 = vmatprep.subr.mxu0 0.0
        %212 = vmatpush1.xpose.msra.mxu0 0.0
        %213 = vmatprep.subr.mxu0 0.0
        %214 = vmatpush1.xpose.msra.mxu0 0.0
        %215 = vmatprep.subr.mxu0 0.0
        %216 = vmatpush1.xpose.msra.mxu0 0.0
        %217 = vmatprep.subr.mxu0 0.0
        %218 = vmatpush1.xpose.msra.mxu0 0.0
        %219 = vmatprep.subr.mxu0 0.0
        %220 = vmatpush1.xpose.msra.mxu0 0.0
        %221 = vmatprep.subr.mxu0 0.0
        %222 = vmatpush1.xpose.msra.mxu0 0.0
        %223 = vmatprep.subr.mxu0 0.0
        %224 = vmatpush1.xpose.msra.mxu0 0.0
        %225 = vmatprep.subr.mxu0 0.0
        %226 = vmatpush1.xpose.msra.mxu0 0.0
        %227 = vmatprep.subr.mxu0 0.0
        %228 = vmatpush1.xpose.msra.mxu0 0.0
        %229 = vmatprep.subr.mxu0 0.0
        %230 = vmatpush1.xpose.msra.mxu0 0.0
        %231 = vmatprep.subr.mxu0 0.0
        %232 = vmatpush1.xpose.msra.mxu0 0.0
        %233 = vmatprep.subr.mxu0 0.0
        %234 = vmatpush1.xpose.msra.mxu0 0.0
        %235 = vmatprep.subr.mxu0 0.0
        %236 = vmatpush1.xpose.msra.mxu0 0.0
        %237 = vmatprep.subr.mxu0 0.0
        %238 = vmatpush1.xpose.msra.mxu0 0.0
        %239 = vmatprep.subr.mxu0 0.0
        %240 = vmatpush1.xpose.msra.mxu0 0.0
        %241 = vmatprep.subr.mxu0 0.0
        %242 = vmatpush1.xpose.msra.mxu0 0.0
        %v243 = vand.u32 %v164, 4294901760
        %v244 = vsub.f32 %v164, %v243
        %v245 = vand.u32 %v244, 4294901760
        %v246 = vsub.f32 %v244, %v245
        %v247 = vand.u32 %v246, 4294901760
        %248 = vmatprep.mubr.f32.mxu0 %v247
        %v249 = vand.u32 %v163, 4294901760
        %v250 = vsub.f32 %v163, %v249
        %v251 = vand.u32 %v250, 4294901760
        %v252 = vsub.f32 %v250, %v251
        %v253 = vand.u32 %v252, 4294901760
        %254 = vmatmul.mubr.f32.gmra.mrb[0].mxu0 %v253
        %v255 = vpop.f32.mrb[0].mxu0
        %v256 = vadd.f32 0.0, %v255
        %v257 = vpop.f32.mrb[0].mxu0
        %v258 = vand.u32 %v166, 4294901760
        %v259 = vsub.f32 %v166, %v258
        %v260 = vand.u32 %v259, 4294901760
        %v261 = vsub.f32 %v259, %v260
        %v262 = vand.u32 %v261, 4294901760
        %263 = vmatprep.mubr.f32.mxu0 %v262
        %v264 = vand.u32 %v165, 4294901760
        %v265 = vsub.f32 %v165, %v264
        %v266 = vand.u32 %v265, 4294901760
        %v267 = vsub.f32 %v265, %v266
        %v268 = vand.u32 %v267, 4294901760
        %269 = vmatmul.mubr.f32.gmra.mrb[0].mxu0 %v268
        %v270 = vpop.f32.mrb[0].mxu0
        %v271 = vadd.f32 0.0, %v270
        %v272 = vpop.f32.mrb[0].mxu0
        %v273 = vand.u32 %v168, 4294901760
        %v274 = vsub.f32 %v168, %v273
        %v275 = vand.u32 %v274, 4294901760
        %v276 = vsub.f32 %v274, %v275
        %v277 = vand.u32 %v276, 4294901760
        %278 = vmatprep.mubr.f32.mxu0 %v277
        %v279 = vand.u32 %v167, 4294901760
        %v280 = vsub.f32 %v167, %v279
        %v281 = vand.u32 %v280, 4294901760
        %v282 = vsub.f32 %v280, %v281
        %v283 = vand.u32 %v282, 4294901760
        %284 = vmatmul.mubr.f32.gmra.mrb[0].mxu0 %v283
        %v285 = vpop.f32.mrb[0].mxu0
        %v286 = vadd.f32 0.0, %v285
        %v287 = vpop.f32.mrb[0].mxu0
        %v288 = vand.u32 %v170, 4294901760
        %v289 = vsub.f32 %v170, %v288
        %v290 = vand.u32 %v289, 4294901760
        %v291 = vsub.f32 %v289, %v290
        %v292 = vand.u32 %v291, 4294901760
        %293 = vmatprep.mubr.f32.mxu0 %v292
        %v294 = vand.u32 %v169, 4294901760
        %v295 = vsub.f32 %v169, %v294
        %v296 = vand.u32 %v295, 4294901760
        %v297 = vsub.f32 %v295, %v296
        %v298 = vand.u32 %v297, 4294901760
        %299 = vmatmul.mubr.f32.gmra.mrb[0].mxu0 %v298
        %v300 = vpop.f32.mrb[0].mxu0
        %v301 = vadd.f32 0.0, %v300
        %v302 = vpop.f32.mrb[0].mxu0
        %303 = vdwg.mxu0
        %v304 = vand.u32 %v164, 4294901760
        %v305 = vsub.f32 %v164, %v304
        %v306 = vand.u32 %v305, 4294901760
        %v307 = vsub.f32 %v305, %v306
        %v308 = vand.u32 %v307, 4294901760
        %309 = vmatprep.subr.mxu0 %v308
        %v310 = vand.u32 %v163, 4294901760
        %v311 = vsub.f32 %v163, %v310
        %v312 = vand.u32 %v311, 4294901760
        %v313 = vsub.f32 %v311, %v312
        %v314 = vand.u32 %v313, 4294901760
        %315 = vmatpush1.xpose.msra.mxu0 %v314
        %v316 = vand.u32 %v166, 4294901760
        %v317 = vsub.f32 %v166, %v316
        %v318 = vand.u32 %v317, 4294901760
        %v319 = vsub.f32 %v317, %v318
        %v320 = vand.u32 %v319, 4294901760
        %321 = vmatprep.subr.mxu0 %v320
        %v322 = vand.u32 %v165, 4294901760
        %v323 = vsub.f32 %v165, %v322
        %v324 = vand.u32 %v323, 4294901760
        %v325 = vsub.f32 %v323, %v324
        %v326 = vand.u32 %v325, 4294901760
        %327 = vmatpush1.xpose.msra.mxu0 %v326
        %v328 = vand.u32 %v168, 4294901760
        %v329 = vsub.f32 %v168, %v328
        %v330 = vand.u32 %v329, 4294901760
        %v331 = vsub.f32 %v329, %v330
        %v332 = vand.u32 %v331, 4294901760
        %333 = vmatprep.subr.mxu0 %v332
        %v334 = vand.u32 %v167, 4294901760
        %v335 = vsub.f32 %v167, %v334
        %v336 = vand.u32 %v335, 4294901760
        %v337 = vsub.f32 %v335, %v336
        %v338 = vand.u32 %v337, 4294901760
        %339 = vmatpush1.xpose.msra.mxu0 %v338
        %v340 = vand.u32 %v170, 4294901760
        %v341 = vsub.f32 %v170, %v340
        %v342 = vand.u32 %v341, 4294901760
        %v343 = vsub.f32 %v341, %v342
        %v344 = vand.u32 %v343, 4294901760
        %345 = vmatprep.subr.mxu0 %v344
        %v346 = vand.u32 %v169, 4294901760
        %v347 = vsub.f32 %v169, %v346
        %v348 = vand.u32 %v347, 4294901760
        %v349 = vsub.f32 %v347, %v348
        %v350 = vand.u32 %v349, 4294901760
        %351 = vmatpush1.xpose.msra.mxu0 %v350
        %352 = vmatprep.subr.mxu0 0.0
        %353 = vmatpush1.xpose.msra.mxu0 0.0
        %354 = vmatprep.subr.mxu0 0.0
        %355 = vmatpush1.xpose.msra.mxu0 0.0
        %356 = vmatprep.subr.mxu0 0.0
        %357 = vmatpush1.xpose.msra.mxu0 0.0
        %358 = vmatprep.subr.mxu0 0.0
        %359 = vmatpush1.xpose.msra.mxu0 0.0
        %360 = vmatprep.subr.mxu0 0.0
        %361 = vmatpush1.xpose.msra.mxu0 0.0
        %362 = vmatprep.subr.mxu0 0.0
        %363 = vmatpush1.xpose.msra.mxu0 0.0
        %364 = vmatprep.subr.mxu0 0.0
        %365 = vmatpush1.xpose.msra.mxu0 0.0
        %366 = vmatprep.subr.mxu0 0.0
        %367 = vmatpush1.xpose.msra.mxu0 0.0
        %368 = vmatprep.subr.mxu0 0.0
        %369 = vmatpush1.xpose.msra.mxu0 0.0
        %370 = vmatprep.subr.mxu0 0.0
        %371 = vmatpush1.xpose.msra.mxu0 0.0
        %372 = vmatprep.subr.mxu0 0.0
        %373 = vmatpush1.xpose.msra.mxu0 0.0
        %374 = vmatprep.subr.mxu0 0.0
        %375 = vmatpush1.xpose.msra.mxu0 0.0
        %376 = vmatprep.subr.mxu0 0.0
        %377 = vmatpush1.xpose.msra.mxu0 0.0
        %378 = vmatprep.subr.mxu0 0.0
        %379 = vmatpush1.xpose.msra.mxu0 0.0
        %380 = vmatprep.subr.mxu0 0.0
        %381 = vmatpush1.xpose.msra.mxu0 0.0
        %382 = vmatprep.subr.mxu0 0.0
        %383 = vmatpush1.xpose.msra.mxu0 0.0
        %384 = vmatprep.subr.mxu0 0.0
        %385 = vmatpush1.xpose.msra.mxu0 0.0
        %386 = vmatprep.subr.mxu0 0.0
        %387 = vmatpush1.xpose.msra.mxu0 0.0
        %388 = vmatprep.subr.mxu0 0.0
        %389 = vmatpush1.xpose.msra.mxu0 0.0
        %390 = vmatprep.subr.mxu0 0.0
        %391 = vmatpush1.xpose.msra.mxu0 0.0
        %392 = vmatprep.subr.mxu0 0.0
        %393 = vmatpush1.xpose.msra.mxu0 0.0
        %394 = vmatprep.subr.mxu0 0.0
        %395 = vmatpush1.xpose.msra.mxu0 0.0
        %396 = vmatprep.subr.mxu0 0.0
        %397 = vmatpush1.xpose.msra.mxu0 0.0
        %398 = vmatprep.subr.mxu0 0.0
        %399 = vmatpush1.xpose.msra.mxu0 0.0
        %400 = vmatprep.subr.mxu0 0.0
        %401 = vmatpush1.xpose.msra.mxu0 0.0
        %402 = vmatprep.subr.mxu0 0.0
        %403 = vmatpush1.xpose.msra.mxu0 0.0
        %404 = vmatprep.subr.mxu0 0.0
        %405 = vmatpush1.xpose.msra.mxu0 0.0
        %406 = vmatprep.subr.mxu0 0.0
        %407 = vmatpush1.xpose.msra.mxu0 0.0
        %v408 = vand.u32 %v164, 4294901760
        %409 = vmatprep.mubr.f32.mxu0 %v408
        %v410 = vand.u32 %v163, 4294901760
        %411 = vmatmul.mubr.f32.gmra.mrb[0].mxu0 %v410
        %v412 = vpop.f32.mrb[0].mxu0
        %v413 = vadd.f32 %v256, %v412
        %v414 = vpop.f32.mrb[0].mxu0
        %v415 = vand.u32 %v166, 4294901760
        %416 = vmatprep.mubr.f32.mxu0 %v415
        %v417 = vand.u32 %v165, 4294901760
        %418 = vmatmul.mubr.f32.gmra.mrb[0].mxu0 %v417
        %v419 = vpop.f32.mrb[0].mxu0
        %v420 = vadd.f32 %v271, %v419
        %v421 = vpop.f32.mrb[0].mxu0
        %v422 = vand.u32 %v168, 4294901760
        %423 = vmatprep.mubr.f32.mxu0 %v422
        %v424 = vand.u32 %v167, 4294901760
        %425 = vmatmul.mubr.f32.gmra.mrb[0].mxu0 %v424
        %v426 = vpop.f32.mrb[0].mxu0
        %v427 = vadd.f32 %v286, %v426
        %v428 = vpop.f32.mrb[0].mxu0
        %v429 = vand.u32 %v170, 4294901760
        %430 = vmatprep.mubr.f32.mxu0 %v429
        %v431 = vand.u32 %v169, 4294901760
        %432 = vmatmul.mubr.f32.gmra.mrb[0].mxu0 %v431
        %v433 = vpop.f32.mrb[0].mxu0
        %v434 = vadd.f32 %v301, %v433
        %v435 = vpop.f32.mrb[0].mxu0
        %436 = vdwg.mxu0
        %v437 = vand.u32 %v164, 4294901760
        %v438 = vsub.f32 %v164, %v437
        %439 = vmatprep.subr.mxu0 %v438
        %v440 = vand.u32 %v163, 4294901760
        %v441 = vsub.f32 %v163, %v440
        %442 = vmatpush1.xpose.msra.mxu0 %v441
        %v443 = vand.u32 %v166, 4294901760
        %v444 = vsub.f32 %v166, %v443
        %445 = vmatprep.subr.mxu0 %v444
        %v446 = vand.u32 %v165, 4294901760
        %v447 = vsub.f32 %v165, %v446
        %448 = vmatpush1.xpose.msra.mxu0 %v447
        %v449 = vand.u32 %v168, 4294901760
        %v450 = vsub.f32 %v168, %v449
        %451 = vmatprep.subr.mxu0 %v450
        %v452 = vand.u32 %v167, 4294901760
        %v453 = vsub.f32 %v167, %v452
        %454 = vmatpush1.xpose.msra.mxu0 %v453
        %v455 = vand.u32 %v170, 4294901760
        %v456 = vsub.f32 %v170, %v455
        %457 = vmatprep.subr.mxu0 %v456
        %v458 = vand.u32 %v169, 4294901760
        %v459 = vsub.f32 %v169, %v458
        %460 = vmatpush1.xpose.msra.mxu0 %v459
        %461 = vmatprep.subr.mxu0 0.0
        %462 = vmatpush1.xpose.msra.mxu0 0.0
        %463 = vmatprep.subr.mxu0 0.0
        %464 = vmatpush1.xpose.msra.mxu0 0.0
        %465 = vmatprep.subr.mxu0 0.0
        %466 = vmatpush1.xpose.msra.mxu0 0.0
        %467 = vmatprep.subr.mxu0 0.0
        %468 = vmatpush1.xpose.msra.mxu0 0.0
        %469 = vmatprep.subr.mxu0 0.0
        %470 = vmatpush1.xpose.msra.mxu0 0.0
        %471 = vmatprep.subr.mxu0 0.0
        %472 = vmatpush1.xpose.msra.mxu0 0.0
        %473 = vmatprep.subr.mxu0 0.0
        %474 = vmatpush1.xpose.msra.mxu0 0.0
        %475 = vmatprep.subr.mxu0 0.0
        %476 = vmatpush1.xpose.msra.mxu0 0.0
        %477 = vmatprep.subr.mxu0 0.0
        %478 = vmatpush1.xpose.msra.mxu0 0.0
        %479 = vmatprep.subr.mxu0 0.0
        %480 = vmatpush1.xpose.msra.mxu0 0.0
        %481 = vmatprep.subr.mxu0 0.0
        %482 = vmatpush1.xpose.msra.mxu0 0.0
        %483 = vmatprep.subr.mxu0 0.0
        %484 = vmatpush1.xpose.msra.mxu0 0.0
        %485 = vmatprep.subr.mxu0 0.0
        %486 = vmatpush1.xpose.msra.mxu0 0.0
        %487 = vmatprep.subr.mxu0 0.0
        %488 = vmatpush1.xpose.msra.mxu0 0.0
        %489 = vmatprep.subr.mxu0 0.0
        %490 = vmatpush1.xpose.msra.mxu0 0.0
        %491 = vmatprep.subr.mxu0 0.0
        %492 = vmatpush1.xpose.msra.mxu0 0.0
        %493 = vmatprep.subr.mxu0 0.0
        %494 = vmatpush1.xpose.msra.mxu0 0.0
        %495 = vmatprep.subr.mxu0 0.0
        %496 = vmatpush1.xpose.msra.mxu0 0.0
        %497 = vmatprep.subr.mxu0 0.0
        %498 = vmatpush1.xpose.msra.mxu0 0.0
        %499 = vmatprep.subr.mxu0 0.0
        %500 = vmatpush1.xpose.msra.mxu0 0.0
        %501 = vmatprep.subr.mxu0 0.0
        %502 = vmatpush1.xpose.msra.mxu0 0.0
        %503 = vmatprep.subr.mxu0 0.0
        %504 = vmatpush1.xpose.msra.mxu0 0.0
        %505 = vmatprep.subr.mxu0 0.0
        %506 = vmatpush1.xpose.msra.mxu0 0.0
        %507 = vmatprep.subr.mxu0 0.0
        %508 = vmatpush1.xpose.msra.mxu0 0.0
        %509 = vmatprep.subr.mxu0 0.0
        %510 = vmatpush1.xpose.msra.mxu0 0.0
        %511 = vmatprep.subr.mxu0 0.0
        %512 = vmatpush1.xpose.msra.mxu0 0.0
        %513 = vmatprep.subr.mxu0 0.0
        %514 = vmatpush1.xpose.msra.mxu0 0.0
        %515 = vmatprep.subr.mxu0 0.0
        %516 = vmatpush1.xpose.msra.mxu0 0.0
        %v517 = vand.u32 %v164, 4294901760
        %v518 = vsub.f32 %v164, %v517
        %519 = vmatprep.mubr.f32.mxu0 %v518
        %v520 = vand.u32 %v163, 4294901760
        %v521 = vsub.f32 %v163, %v520
        %522 = vmatmul.mubr.f32.gmra.mrb[0].mxu0 %v521
        %v523 = vpop.f32.mrb[0].mxu0
        %v524 = vadd.f32 %v413, %v523
        %v525 = vpop.f32.mrb[0].mxu0
        %v526 = vand.u32 %v166, 4294901760
        %v527 = vsub.f32 %v166, %v526
        %528 = vmatprep.mubr.f32.mxu0 %v527
        %v529 = vand.u32 %v165, 4294901760
        %v530 = vsub.f32 %v165, %v529
        %531 = vmatmul.mubr.f32.gmra.mrb[0].mxu0 %v530
        %v532 = vpop.f32.mrb[0].mxu0
        %v533 = vadd.f32 %v420, %v532
        %v534 = vpop.f32.mrb[0].mxu0
        %v535 = vand.u32 %v168, 4294901760
        %v536 = vsub.f32 %v168, %v535
        %537 = vmatprep.mubr.f32.mxu0 %v536
        %v538 = vand.u32 %v167, 4294901760
        %v539 = vsub.f32 %v167, %v538
        %540 = vmatmul.mubr.f32.gmra.mrb[0].mxu0 %v539
        %v541 = vpop.f32.mrb[0].mxu0
        %v542 = vadd.f32 %v427, %v541
        %v543 = vpop.f32.mrb[0].mxu0
        %v544 = vand.u32 %v170, 4294901760
        %v545 = vsub.f32 %v170, %v544
        %546 = vmatprep.mubr.f32.mxu0 %v545
        %v547 = vand.u32 %v169, 4294901760
        %v548 = vsub.f32 %v169, %v547
        %549 = vmatmul.mubr.f32.gmra.mrb[0].mxu0 %v548
        %v550 = vpop.f32.mrb[0].mxu0
        %v551 = vadd.f32 %v434, %v550
        %v552 = vpop.f32.mrb[0].mxu0
        %553 = vdwg.mxu0
        %v554 = vand.u32 %v164, 4294901760
        %555 = vmatprep.subr.mxu0 %v554
        %v556 = vand.u32 %v163, 4294901760
        %557 = vmatpush1.xpose.msra.mxu0 %v556
        %v558 = vand.u32 %v166, 4294901760
        %559 = vmatprep.subr.mxu0 %v558
        %v560 = vand.u32 %v165, 4294901760
        %561 = vmatpush1.xpose.msra.mxu0 %v560
        %v562 = vand.u32 %v168, 4294901760
        %563 = vmatprep.subr.mxu0 %v562
        %v564 = vand.u32 %v167, 4294901760
        %565 = vmatpush1.xpose.msra.mxu0 %v564
        %v566 = vand.u32 %v170, 4294901760
        %567 = vmatprep.subr.mxu0 %v566
        %v568 = vand.u32 %v169, 4294901760
        %569 = vmatpush1.xpose.msra.mxu0 %v568
        %570 = vmatprep.subr.mxu0 0.0
        %571 = vmatpush1.xpose.msra.mxu0 0.0
        %572 = vmatprep.subr.mxu0 0.0
        %573 = vmatpush1.xpose.msra.mxu0 0.0
        %574 = vmatprep.subr.mxu0 0.0
        %575 = vmatpush1.xpose.msra.mxu0 0.0
        %576 = vmatprep.subr.mxu0 0.0
        %577 = vmatpush1.xpose.msra.mxu0 0.0
        %578 = vmatprep.subr.mxu0 0.0
        %579 = vmatpush1.xpose.msra.mxu0 0.0
        %580 = vmatprep.subr.mxu0 0.0
        %581 = vmatpush1.xpose.msra.mxu0 0.0
        %582 = vmatprep.subr.mxu0 0.0
        %583 = vmatpush1.xpose.msra.mxu0 0.0
        %584 = vmatprep.subr.mxu0 0.0
        %585 = vmatpush1.xpose.msra.mxu0 0.0
        %586 = vmatprep.subr.mxu0 0.0
        %587 = vmatpush1.xpose.msra.mxu0 0.0
        %588 = vmatprep.subr.mxu0 0.0
        %589 = vmatpush1.xpose.msra.mxu0 0.0
        %590 = vmatprep.subr.mxu0 0.0
        %591 = vmatpush1.xpose.msra.mxu0 0.0
        %592 = vmatprep.subr.mxu0 0.0
        %593 = vmatpush1.xpose.msra.mxu0 0.0
        %594 = vmatprep.subr.mxu0 0.0
        %595 = vmatpush1.xpose.msra.mxu0 0.0
        %596 = vmatprep.subr.mxu0 0.0
        %597 = vmatpush1.xpose.msra.mxu0 0.0
        %598 = vmatprep.subr.mxu0 0.0
        %599 = vmatpush1.xpose.msra.mxu0 0.0
        %600 = vmatprep.subr.mxu0 0.0
        %601 = vmatpush1.xpose.msra.mxu0 0.0
        %602 = vmatprep.subr.mxu0 0.0
        %603 = vmatpush1.xpose.msra.mxu0 0.0
        %604 = vmatprep.subr.mxu0 0.0
        %605 = vmatpush1.xpose.msra.mxu0 0.0
        %606 = vmatprep.subr.mxu0 0.0
        %607 = vmatpush1.xpose.msra.mxu0 0.0
        %608 = vmatprep.subr.mxu0 0.0
        %609 = vmatpush1.xpose.msra.mxu0 0.0
        %610 = vmatprep.subr.mxu0 0.0
        %611 = vmatpush1.xpose.msra.mxu0 0.0
        %612 = vmatprep.subr.mxu0 0.0
        %613 = vmatpush1.xpose.msra.mxu0 0.0
        %614 = vmatprep.subr.mxu0 0.0
        %615 = vmatpush1.xpose.msra.mxu0 0.0
        %616 = vmatprep.subr.mxu0 0.0
        %617 = vmatpush1.xpose.msra.mxu0 0.0
        %618 = vmatprep.subr.mxu0 0.0
        %619 = vmatpush1.xpose.msra.mxu0 0.0
        %620 = vmatprep.subr.mxu0 0.0
        %621 = vmatpush1.xpose.msra.mxu0 0.0
        %622 = vmatprep.subr.mxu0 0.0
        %623 = vmatpush1.xpose.msra.mxu0 0.0
        %624 = vmatprep.subr.mxu0 0.0
        %625 = vmatpush1.xpose.msra.mxu0 0.0
        %v626 = vand.u32 %v164, 4294901760
        %v627 = vsub.f32 %v164, %v626
        %v628 = vand.u32 %v627, 4294901760
        %629 = vmatprep.mubr.f32.mxu0 %v628
        %v630 = vand.u32 %v163, 4294901760
        %v631 = vsub.f32 %v163, %v630
        %v632 = vand.u32 %v631, 4294901760
        %633 = vmatmul.mubr.f32.gmra.mrb[0].mxu0 %v632
        %v634 = vpop.f32.mrb[0].mxu0
        %v635 = vadd.f32 %v524, %v634
        %v636 = vpop.f32.mrb[0].mxu0
        %v637 = vand.u32 %v166, 4294901760
        %v638 = vsub.f32 %v166, %v637
        %v639 = vand.u32 %v638, 4294901760
        %640 = vmatprep.mubr.f32.mxu0 %v639
        %v641 = vand.u32 %v165, 4294901760
        %v642 = vsub.f32 %v165, %v641
        %v643 = vand.u32 %v642, 4294901760
        %644 = vmatmul.mubr.f32.gmra.mrb[0].mxu0 %v643
        %v645 = vpop.f32.mrb[0].mxu0
        %v646 = vadd.f32 %v533, %v645
        %v647 = vpop.f32.mrb[0].mxu0
        %v648 = vand.u32 %v168, 4294901760
        %v649 = vsub.f32 %v168, %v648
        %v650 = vand.u32 %v649, 4294901760
        %651 = vmatprep.mubr.f32.mxu0 %v650
        %v652 = vand.u32 %v167, 4294901760
        %v653 = vsub.f32 %v167, %v652
        %v654 = vand.u32 %v653, 4294901760
        %655 = vmatmul.mubr.f32.gmra.mrb[0].mxu0 %v654
        %v656 = vpop.f32.mrb[0].mxu0
        %v657 = vadd.f32 %v542, %v656
        %v658 = vpop.f32.mrb[0].mxu0
        %v659 = vand.u32 %v170, 4294901760
        %v660 = vsub.f32 %v170, %v659
        %v661 = vand.u32 %v660, 4294901760
        %662 = vmatprep.mubr.f32.mxu0 %v661
        %v663 = vand.u32 %v169, 4294901760
        %v664 = vsub.f32 %v169, %v663
        %v665 = vand.u32 %v664, 4294901760
        %666 = vmatmul.mubr.f32.gmra.mrb[0].mxu0 %v665
        %v667 = vpop.f32.mrb[0].mxu0
        %v668 = vadd.f32 %v551, %v667
        %v669 = vpop.f32.mrb[0].mxu0
        %670 = vdwg.mxu0
        %v671 = vand.u32 %v164, 4294901760
        %v672 = vsub.f32 %v164, %v671
        %v673 = vand.u32 %v672, 4294901760
        %674 = vmatprep.subr.mxu0 %v673
        %v675 = vand.u32 %v163, 4294901760
        %v676 = vsub.f32 %v163, %v675
        %v677 = vand.u32 %v676, 4294901760
        %678 = vmatpush1.xpose.msra.mxu0 %v677
        %v679 = vand.u32 %v166, 4294901760
        %v680 = vsub.f32 %v166, %v679
        %v681 = vand.u32 %v680, 4294901760
        %682 = vmatprep.subr.mxu0 %v681
        %v683 = vand.u32 %v165, 4294901760
        %v684 = vsub.f32 %v165, %v683
        %v685 = vand.u32 %v684, 4294901760
        %686 = vmatpush1.xpose.msra.mxu0 %v685
        %v687 = vand.u32 %v168, 4294901760
        %v688 = vsub.f32 %v168, %v687
        %v689 = vand.u32 %v688, 4294901760
        %690 = vmatprep.subr.mxu0 %v689
        %v691 = vand.u32 %v167, 4294901760
        %v692 = vsub.f32 %v167, %v691
        %v693 = vand.u32 %v692, 4294901760
        %694 = vmatpush1.xpose.msra.mxu0 %v693
        %v695 = vand.u32 %v170, 4294901760
        %v696 = vsub.f32 %v170, %v695
        %v697 = vand.u32 %v696, 4294901760
        %698 = vmatprep.subr.mxu0 %v697
        %v699 = vand.u32 %v169, 4294901760
        %v700 = vsub.f32 %v169, %v699
        %v701 = vand.u32 %v700, 4294901760
        %702 = vmatpush1.xpose.msra.mxu0 %v701
        %703 = vmatprep.subr.mxu0 0.0
        %704 = vmatpush1.xpose.msra.mxu0 0.0
        %705 = vmatprep.subr.mxu0 0.0
        %706 = vmatpush1.xpose.msra.mxu0 0.0
        %707 = vmatprep.subr.mxu0 0.0
        %708 = vmatpush1.xpose.msra.mxu0 0.0
        %709 = vmatprep.subr.mxu0 0.0
        %710 = vmatpush1.xpose.msra.mxu0 0.0
        %711 = vmatprep.subr.mxu0 0.0
        %712 = vmatpush1.xpose.msra.mxu0 0.0
        %713 = vmatprep.subr.mxu0 0.0
        %714 = vmatpush1.xpose.msra.mxu0 0.0
        %715 = vmatprep.subr.mxu0 0.0
        %716 = vmatpush1.xpose.msra.mxu0 0.0
        %717 = vmatprep.subr.mxu0 0.0
        %718 = vmatpush1.xpose.msra.mxu0 0.0
        %719 = vmatprep.subr.mxu0 0.0
        %720 = vmatpush1.xpose.msra.mxu0 0.0
        %721 = vmatprep.subr.mxu0 0.0
        %722 = vmatpush1.xpose.msra.mxu0 0.0
        %723 = vmatprep.subr.mxu0 0.0
        %724 = vmatpush1.xpose.msra.mxu0 0.0
        %725 = vmatprep.subr.mxu0 0.0
        %726 = vmatpush1.xpose.msra.mxu0 0.0
        %727 = vmatprep.subr.mxu0 0.0
        %728 = vmatpush1.xpose.msra.mxu0 0.0
        %729 = vmatprep.subr.mxu0 0.0
        %730 = vmatpush1.xpose.msra.mxu0 0.0
        %731 = vmatprep.subr.mxu0 0.0
        %732 = vmatpush1.xpose.msra.mxu0 0.0
        %733 = vmatprep.subr.mxu0 0.0
        %734 = vmatpush1.xpose.msra.mxu0 0.0
        %735 = vmatprep.subr.mxu0 0.0
        %736 = vmatpush1.xpose.msra.mxu0 0.0
        %737 = vmatprep.subr.mxu0 0.0
        %738 = vmatpush1.xpose.msra.mxu0 0.0
        %739 = vmatprep.subr.mxu0 0.0
        %740 = vmatpush1.xpose.msra.mxu0 0.0
        %741 = vmatprep.subr.mxu0 0.0
        %742 = vmatpush1.xpose.msra.mxu0 0.0
        %743 = vmatprep.subr.mxu0 0.0
        %744 = vmatpush1.xpose.msra.mxu0 0.0
        %745 = vmatprep.subr.mxu0 0.0
        %746 = vmatpush1.xpose.msra.mxu0 0.0
        %747 = vmatprep.subr.mxu0 0.0
        %748 = vmatpush1.xpose.msra.mxu0 0.0
        %749 = vmatprep.subr.mxu0 0.0
        %750 = vmatpush1.xpose.msra.mxu0 0.0
        %751 = vmatprep.subr.mxu0 0.0
        %752 = vmatpush1.xpose.msra.mxu0 0.0
        %753 = vmatprep.subr.mxu0 0.0
        %754 = vmatpush1.xpose.msra.mxu0 0.0
        %755 = vmatprep.subr.mxu0 0.0
        %756 = vmatpush1.xpose.msra.mxu0 0.0
        %757 = vmatprep.subr.mxu0 0.0
        %758 = vmatpush1.xpose.msra.mxu0 0.0
        %v759 = vand.u32 %v164, 4294901760
        %760 = vmatprep.mubr.f32.mxu0 %v759
        %v761 = vand.u32 %v163, 4294901760
        %762 = vmatmul.mubr.f32.gmra.mrb[0].mxu0 %v761
        %v763 = vpop.f32.mrb[0].mxu0
        %v764 = vadd.f32 %v635, %v763
        %v765 = vpop.f32.mrb[0].mxu0
        %v766 = vand.u32 %v166, 4294901760
        %767 = vmatprep.mubr.f32.mxu0 %v766
        %v768 = vand.u32 %v165, 4294901760
        %769 = vmatmul.mubr.f32.gmra.mrb[0].mxu0 %v768
        %v770 = vpop.f32.mrb[0].mxu0
        %v771 = vadd.f32 %v646, %v770
        %v772 = vpop.f32.mrb[0].mxu0
        %v773 = vand.u32 %v168, 4294901760
        %774 = vmatprep.mubr.f32.mxu0 %v773
        %v775 = vand.u32 %v167, 4294901760
        %776 = vmatmul.mubr.f32.gmra.mrb[0].mxu0 %v775
        %v777 = vpop.f32.mrb[0].mxu0
        %v778 = vadd.f32 %v657, %v777
        %v779 = vpop.f32.mrb[0].mxu0
        %v780 = vand.u32 %v170, 4294901760
        %781 = vmatprep.mubr.f32.mxu0 %v780
        %v782 = vand.u32 %v169, 4294901760
        %783 = vmatmul.mubr.f32.gmra.mrb[0].mxu0 %v782
        %v784 = vpop.f32.mrb[0].mxu0
        %v785 = vadd.f32 %v668, %v784
        %v786 = vpop.f32.mrb[0].mxu0
        %787 = vdwg.mxu0
        %v788 = vand.u32 %v164, 4294901760
        %789 = vmatprep.subr.mxu0 %v788
        %v790 = vand.u32 %v163, 4294901760
        %791 = vmatpush1.xpose.msra.mxu0 %v790
        %v792 = vand.u32 %v166, 4294901760
        %793 = vmatprep.subr.mxu0 %v792
        %v794 = vand.u32 %v165, 4294901760
        %795 = vmatpush1.xpose.msra.mxu0 %v794
        %v796 = vand.u32 %v168, 4294901760
        %797 = vmatprep.subr.mxu0 %v796
        %v798 = vand.u32 %v167, 4294901760
        %799 = vmatpush1.xpose.msra.mxu0 %v798
        %v800 = vand.u32 %v170, 4294901760
        %801 = vmatprep.subr.mxu0 %v800
        %v802 = vand.u32 %v169, 4294901760
        %803 = vmatpush1.xpose.msra.mxu0 %v802
        %804 = vmatprep.subr.mxu0 0.0
        %805 = vmatpush1.xpose.msra.mxu0 0.0
        %806 = vmatprep.subr.mxu0 0.0
        %807 = vmatpush1.xpose.msra.mxu0 0.0
        %808 = vmatprep.subr.mxu0 0.0
        %809 = vmatpush1.xpose.msra.mxu0 0.0
        %810 = vmatprep.subr.mxu0 0.0
        %811 = vmatpush1.xpose.msra.mxu0 0.0
        %812 = vmatprep.subr.mxu0 0.0
        %813 = vmatpush1.xpose.msra.mxu0 0.0
        %814 = vmatprep.subr.mxu0 0.0
        %815 = vmatpush1.xpose.msra.mxu0 0.0
        %816 = vmatprep.subr.mxu0 0.0
        %817 = vmatpush1.xpose.msra.mxu0 0.0
        %818 = vmatprep.subr.mxu0 0.0
        %819 = vmatpush1.xpose.msra.mxu0 0.0
        %820 = vmatprep.subr.mxu0 0.0
        %821 = vmatpush1.xpose.msra.mxu0 0.0
        %822 = vmatprep.subr.mxu0 0.0
        %823 = vmatpush1.xpose.msra.mxu0 0.0
        %824 = vmatprep.subr.mxu0 0.0
        %825 = vmatpush1.xpose.msra.mxu0 0.0
        %826 = vmatprep.subr.mxu0 0.0
        %827 = vmatpush1.xpose.msra.mxu0 0.0
        %828 = vmatprep.subr.mxu0 0.0
        %829 = vmatpush1.xpose.msra.mxu0 0.0
        %830 = vmatprep.subr.mxu0 0.0
        %831 = vmatpush1.xpose.msra.mxu0 0.0
        %832 = vmatprep.subr.mxu0 0.0
        %833 = vmatpush1.xpose.msra.mxu0 0.0
        %834 = vmatprep.subr.mxu0 0.0
        %835 = vmatpush1.xpose.msra.mxu0 0.0
        %836 = vmatprep.subr.mxu0 0.0
        %837 = vmatpush1.xpose.msra.mxu0 0.0
        %838 = vmatprep.subr.mxu0 0.0
        %839 = vmatpush1.xpose.msra.mxu0 0.0
        %840 = vmatprep.subr.mxu0 0.0
        %841 = vmatpush1.xpose.msra.mxu0 0.0
        %842 = vmatprep.subr.mxu0 0.0
        %843 = vmatpush1.xpose.msra.mxu0 0.0
        %844 = vmatprep.subr.mxu0 0.0
        %845 = vmatpush1.xpose.msra.mxu0 0.0
        %846 = vmatprep.subr.mxu0 0.0
        %847 = vmatpush1.xpose.msra.mxu0 0.0
        %848 = vmatprep.subr.mxu0 0.0
        %849 = vmatpush1.xpose.msra.mxu0 0.0
        %850 = vmatprep.subr.mxu0 0.0
        %851 = vmatpush1.xpose.msra.mxu0 0.0
        %852 = vmatprep.subr.mxu0 0.0
        %853 = vmatpush1.xpose.msra.mxu0 0.0
        %854 = vmatprep.subr.mxu0 0.0
        %855 = vmatpush1.xpose.msra.mxu0 0.0
        %856 = vmatprep.subr.mxu0 0.0
        %857 = vmatpush1.xpose.msra.mxu0 0.0
        %858 = vmatprep.subr.mxu0 0.0
        %859 = vmatpush1.xpose.msra.mxu0 0.0
        %v860 = vand.u32 %v164, 4294901760
        %861 = vmatprep.mubr.f32.mxu0 %v860
        %v862 = vand.u32 %v163, 4294901760
        %863 = vmatmul.mubr.f32.gmra.mrb[0].mxu0 %v862
        %v864 = vpop.f32.mrb[0].mxu0
        %v865 = vadd.f32 %v764, %v864
        %v866 = vpop.f32.mrb[0].mxu0
        %v867 = vand.u32 %v166, 4294901760
        %868 = vmatprep.mubr.f32.mxu0 %v867
        %v869 = vand.u32 %v165, 4294901760
        %870 = vmatmul.mubr.f32.gmra.mrb[0].mxu0 %v869
        %v871 = vpop.f32.mrb[0].mxu0
        %v872 = vadd.f32 %v771, %v871
        %v873 = vpop.f32.mrb[0].mxu0
        %v874 = vand.u32 %v168, 4294901760
        %875 = vmatprep.mubr.f32.mxu0 %v874
        %v876 = vand.u32 %v167, 4294901760
        %877 = vmatmul.mubr.f32.gmra.mrb[0].mxu0 %v876
        %v878 = vpop.f32.mrb[0].mxu0
        %v879 = vadd.f32 %v778, %v878
        %v880 = vpop.f32.mrb[0].mxu0
        %v881 = vand.u32 %v170, 4294901760
        %882 = vmatprep.mubr.f32.mxu0 %v881
        %v883 = vand.u32 %v169, 4294901760
        %884 = vmatmul.mubr.f32.gmra.mrb[0].mxu0 %v883
        %v885 = vpop.f32.mrb[0].mxu0
        %v886 = vadd.f32 %v785, %v885
        %v887 = vpop.f32.mrb[0].mxu0
        %888 = vdwg.mxu0
        %vm889 = vcmask 261120
        %v890 = vsel %vm889, %v865, inf
        %891 = vmin.xlane.f32.xlu0 %v890
        %v892 = vpop.xlane.xlu0 %891
        %v893 = vsel %vm889, %v872, inf
        %894 = vmin.xlane.f32.xlu0 %v893
        %v895 = vpop.xlane.xlu0 %894
        %v896 = vsel %vm889, %v879, inf
        %897 = vmin.xlane.f32.xlu0 %v896
        %v898 = vpop.xlane.xlu0 %897
        %v899 = vsel %vm889, %v886, inf
        %900 = vmin.xlane.f32.xlu0 %v899
        %v901 = vpop.xlane.xlu0 %900
        %v902 = vsub.f32 %v892, %v865
        %v903 = vsub.f32 %v895, %v872
        %v904 = vsub.f32 %v898, %v879
        %v905 = vsub.f32 %v901, %v886
        %v906 = vmul.f32 %v902, 1.442695
        %v907 = vpow.pop %v906
        %v908 = vmul.f32 %v903, 1.442695
        %v909 = vpow.pop %v908
        %v910 = vmul.f32 %v904, 1.442695
        %v911 = vpow.pop %v910
        %v912 = vmul.f32 %v905, 1.442695
        %v913 = vpow.pop %v912
        %v914 = vsel %vm889, %v907, 0.0
        %915 = vadd.xlane.f32.xlu0 %v914
        %v916 = vpop.xlane.xlu0 %915
        %v917 = vsel %vm889, %v909, 0.0
        %918 = vadd.xlane.f32.xlu0 %v917
        %v919 = vpop.xlane.xlu0 %918
        %v920 = vsel %vm889, %v911, 0.0
        %921 = vadd.xlane.f32.xlu0 %v920
        %v922 = vpop.xlane.xlu0 %921
        %v923 = vsel %vm889, %v913, 0.0
        %924 = vadd.xlane.f32.xlu0 %v923
        %v925 = vpop.xlane.xlu0 %924
        %v926 = vrcp.pop %v916
        %v927 = vmul.f32 %v907, %v926
        %v928 = vrcp.pop %v919
        %v929 = vmul.f32 %v909, %v928
        %v930 = vrcp.pop %v922
        %v931 = vmul.f32 %v911, %v930
        %v932 = vrcp.pop %v925
        %v933 = vmul.f32 %v913, %v932
        %v935 = vsel %vm889, %v927, 0
        %v938 = vsel %vm889, %v929, 0
        %v941 = vsel %vm889, %v931, 0
        %v944 = vsel %vm889, %v933, 0
        %v946 = vand.u32 %v164, 4294901760
        %947 = vmatprep.subr.mxu0 %v946
        %v948 = vand.u32 %v163, 4294901760
        %949 = vmatpush1.msra.mxu0 %v948
        %v950 = vand.u32 %v166, 4294901760
        %951 = vmatprep.subr.mxu0 %v950
        %v952 = vand.u32 %v165, 4294901760
        %953 = vmatpush1.msra.mxu0 %v952
        %v954 = vand.u32 %v168, 4294901760
        %955 = vmatprep.subr.mxu0 %v954
        %v956 = vand.u32 %v167, 4294901760
        %957 = vmatpush1.msra.mxu0 %v956
        %v958 = vand.u32 %v170, 4294901760
        %959 = vmatprep.subr.mxu0 %v958
        %v960 = vand.u32 %v169, 4294901760
        %961 = vmatpush1.msra.mxu0 %v960
        %962 = vmatprep.subr.mxu0 0.0
        %963 = vmatpush1.msra.mxu0 0.0
        %964 = vmatprep.subr.mxu0 0.0
        %965 = vmatpush1.msra.mxu0 0.0
        %966 = vmatprep.subr.mxu0 0.0
        %967 = vmatpush1.msra.mxu0 0.0
        %968 = vmatprep.subr.mxu0 0.0
        %969 = vmatpush1.msra.mxu0 0.0
        %970 = vmatprep.subr.mxu0 0.0
        %971 = vmatpush1.msra.mxu0 0.0
        %972 = vmatprep.subr.mxu0 0.0
        %973 = vmatpush1.msra.mxu0 0.0
        %974 = vmatprep.subr.mxu0 0.0
        %975 = vmatpush1.msra.mxu0 0.0
        %976 = vmatprep.subr.mxu0 0.0
        %977 = vmatpush1.msra.mxu0 0.0
        %978 = vmatprep.subr.mxu0 0.0
        %979 = vmatpush1.msra.mxu0 0.0
        %980 = vmatprep.subr.mxu0 0.0
        %981 = vmatpush1.msra.mxu0 0.0
        %982 = vmatprep.subr.mxu0 0.0
        %983 = vmatpush1.msra.mxu0 0.0
        %984 = vmatprep.subr.mxu0 0.0
        %985 = vmatpush1.msra.mxu0 0.0
        %986 = vmatprep.subr.mxu0 0.0
        %987 = vmatpush1.msra.mxu0 0.0
        %988 = vmatprep.subr.mxu0 0.0
        %989 = vmatpush1.msra.mxu0 0.0
        %990 = vmatprep.subr.mxu0 0.0
        %991 = vmatpush1.msra.mxu0 0.0
        %992 = vmatprep.subr.mxu0 0.0
        %993 = vmatpush1.msra.mxu0 0.0
        %994 = vmatprep.subr.mxu0 0.0
        %995 = vmatpush1.msra.mxu0 0.0
        %996 = vmatprep.subr.mxu0 0.0
        %997 = vmatpush1.msra.mxu0 0.0
        %998 = vmatprep.subr.mxu0 0.0
        %999 = vmatpush1.msra.mxu0 0.0
        %1000 = vmatprep.subr.mxu0 0.0
        %1001 = vmatpush1.msra.mxu0 0.0
        %1002 = vmatprep.subr.mxu0 0.0
        %1003 = vmatpush1.msra.mxu0 0.0
        %1004 = vmatprep.subr.mxu0 0.0
        %1005 = vmatpush1.msra.mxu0 0.0
        %1006 = vmatprep.subr.mxu0 0.0
        %1007 = vmatpush1.msra.mxu0 0.0
        %1008 = vmatprep.subr.mxu0 0.0
        %1009 = vmatpush1.msra.mxu0 0.0
        %1010 = vmatprep.subr.mxu0 0.0
        %1011 = vmatpush1.msra.mxu0 0.0
        %1012 = vmatprep.subr.mxu0 0.0
        %1013 = vmatpush1.msra.mxu0 0.0
        %1014 = vmatprep.subr.mxu0 0.0
        %1015 = vmatpush1.msra.mxu0 0.0
        %1016 = vmatprep.subr.mxu0 0.0
        %1017 = vmatpush1.msra.mxu0 0.0
        %1018 = vmatprep.mubr.f32.mxu0 0.0
        %v1019 = vand.u32 %v935, 4294901760
        %v1020 = vsub.f32 %v935, %v1019
        %v1021 = vand.u32 %v1020, 4294901760
        %v1022 = vsub.f32 %v1020, %v1021
        %v1023 = vand.u32 %v1022, 4294901760
        %1024 = vmatmul.mubr.f32.gmra.mrb[0].mxu0 %v1023
        %v1025 = vpop.f32.mrb[0].mxu0
        %v1026 = vadd.f32 0.0, %v1025
        %v1027 = vpop.f32.mrb[0].mxu0
        %v1028 = vadd.f32 0.0, %v1027
        %1029 = vmatprep.mubr.f32.mxu0 0.0
        %v1030 = vand.u32 %v938, 4294901760
        %v1031 = vsub.f32 %v938, %v1030
        %v1032 = vand.u32 %v1031, 4294901760
        %v1033 = vsub.f32 %v1031, %v1032
        %v1034 = vand.u32 %v1033, 4294901760
        %1035 = vmatmul.mubr.f32.gmra.mrb[0].mxu0 %v1034
        %v1036 = vpop.f32.mrb[0].mxu0
        %v1037 = vadd.f32 0.0, %v1036
        %v1038 = vpop.f32.mrb[0].mxu0
        %v1039 = vadd.f32 0.0, %v1038
        %1040 = vmatprep.mubr.f32.mxu0 0.0
        %v1041 = vand.u32 %v941, 4294901760
        %v1042 = vsub.f32 %v941, %v1041
        %v1043 = vand.u32 %v1042, 4294901760
        %v1044 = vsub.f32 %v1042, %v1043
        %v1045 = vand.u32 %v1044, 4294901760
        %1046 = vmatmul.mubr.f32.gmra.mrb[0].mxu0 %v1045
        %v1047 = vpop.f32.mrb[0].mxu0
        %v1048 = vadd.f32 0.0, %v1047
        %v1049 = vpop.f32.mrb[0].mxu0
        %v1050 = vadd.f32 0.0, %v1049
        %1051 = vmatprep.mubr.f32.mxu0 0.0
        %v1052 = vand.u32 %v944, 4294901760
        %v1053 = vsub.f32 %v944, %v1052
        %v1054 = vand.u32 %v1053, 4294901760
        %v1055 = vsub.f32 %v1053, %v1054
        %v1056 = vand.u32 %v1055, 4294901760
        %1057 = vmatmul.mubr.f32.gmra.mrb[0].mxu0 %v1056
        %v1058 = vpop.f32.mrb[0].mxu0
        %v1059 = vadd.f32 0.0, %v1058
        %v1060 = vpop.f32.mrb[0].mxu0
        %v1061 = vadd.f32 0.0, %v1060
        %1062 = vdwg.mxu0
        %v1063 = vand.u32 %v164, 4294901760
        %v1064 = vsub.f32 %v164, %v1063
        %v1065 = vand.u32 %v1064, 4294901760
        %v1066 = vsub.f32 %v1064, %v1065
        %v1067 = vand.u32 %v1066, 4294901760
        %1068 = vmatprep.subr.mxu0 %v1067
        %v1069 = vand.u32 %v163, 4294901760
        %v1070 = vsub.f32 %v163, %v1069
        %v1071 = vand.u32 %v1070, 4294901760
        %v1072 = vsub.f32 %v1070, %v1071
        %v1073 = vand.u32 %v1072, 4294901760
        %1074 = vmatpush1.msra.mxu0 %v1073
        %v1075 = vand.u32 %v166, 4294901760
        %v1076 = vsub.f32 %v166, %v1075
        %v1077 = vand.u32 %v1076, 4294901760
        %v1078 = vsub.f32 %v1076, %v1077
        %v1079 = vand.u32 %v1078, 4294901760
        %1080 = vmatprep.subr.mxu0 %v1079
        %v1081 = vand.u32 %v165, 4294901760
        %v1082 = vsub.f32 %v165, %v1081
        %v1083 = vand.u32 %v1082, 4294901760
        %v1084 = vsub.f32 %v1082, %v1083
        %v1085 = vand.u32 %v1084, 4294901760
        %1086 = vmatpush1.msra.mxu0 %v1085
        %v1087 = vand.u32 %v168, 4294901760
        %v1088 = vsub.f32 %v168, %v1087
        %v1089 = vand.u32 %v1088, 4294901760
        %v1090 = vsub.f32 %v1088, %v1089
        %v1091 = vand.u32 %v1090, 4294901760
        %1092 = vmatprep.subr.mxu0 %v1091
        %v1093 = vand.u32 %v167, 4294901760
        %v1094 = vsub.f32 %v167, %v1093
        %v1095 = vand.u32 %v1094, 4294901760
        %v1096 = vsub.f32 %v1094, %v1095
        %v1097 = vand.u32 %v1096, 4294901760
        %1098 = vmatpush1.msra.mxu0 %v1097
        %v1099 = vand.u32 %v170, 4294901760
        %v1100 = vsub.f32 %v170, %v1099
        %v1101 = vand.u32 %v1100, 4294901760
        %v1102 = vsub.f32 %v1100, %v1101
        %v1103 = vand.u32 %v1102, 4294901760
        %1104 = vmatprep.subr.mxu0 %v1103
        %v1105 = vand.u32 %v169, 4294901760
        %v1106 = vsub.f32 %v169, %v1105
        %v1107 = vand.u32 %v1106, 4294901760
        %v1108 = vsub.f32 %v1106, %v1107
        %v1109 = vand.u32 %v1108, 4294901760
        %1110 = vmatpush1.msra.mxu0 %v1109
        %1111 = vmatprep.subr.mxu0 0.0
        %1112 = vmatpush1.msra.mxu0 0.0
        %1113 = vmatprep.subr.mxu0 0.0
        %1114 = vmatpush1.msra.mxu0 0.0
        %1115 = vmatprep.subr.mxu0 0.0
        %1116 = vmatpush1.msra.mxu0 0.0
        %1117 = vmatprep.subr.mxu0 0.0
        %1118 = vmatpush1.msra.mxu0 0.0
        %1119 = vmatprep.subr.mxu0 0.0
        %1120 = vmatpush1.msra.mxu0 0.0
        %1121 = vmatprep.subr.mxu0 0.0
        %1122 = vmatpush1.msra.mxu0 0.0
        %1123 = vmatprep.subr.mxu0 0.0
        %1124 = vmatpush1.msra.mxu0 0.0
        %1125 = vmatprep.subr.mxu0 0.0
        %1126 = vmatpush1.msra.mxu0 0.0
        %1127 = vmatprep.subr.mxu0 0.0
        %1128 = vmatpush1.msra.mxu0 0.0
        %1129 = vmatprep.subr.mxu0 0.0
        %1130 = vmatpush1.msra.mxu0 0.0
        %1131 = vmatprep.subr.mxu0 0.0
        %1132 = vmatpush1.msra.mxu0 0.0
        %1133 = vmatprep.subr.mxu0 0.0
        %1134 = vmatpush1.msra.mxu0 0.0
        %1135 = vmatprep.subr.mxu0 0.0
        %1136 = vmatpush1.msra.mxu0 0.0
        %1137 = vmatprep.subr.mxu0 0.0
        %1138 = vmatpush1.msra.mxu0 0.0
        %1139 = vmatprep.subr.mxu0 0.0
        %1140 = vmatpush1.msra.mxu0 0.0
        %1141 = vmatprep.subr.mxu0 0.0
        %1142 = vmatpush1.msra.mxu0 0.0
        %1143 = vmatprep.subr.mxu0 0.0
        %1144 = vmatpush1.msra.mxu0 0.0
        %1145 = vmatprep.subr.mxu0 0.0
        %1146 = vmatpush1.msra.mxu0 0.0
        %1147 = vmatprep.subr.mxu0 0.0
        %1148 = vmatpush1.msra.mxu0 0.0
        %1149 = vmatprep.subr.mxu0 0.0
        %1150 = vmatpush1.msra.mxu0 0.0
        %1151 = vmatprep.subr.mxu0 0.0
        %1152 = vmatpush1.msra.mxu0 0.0
        %1153 = vmatprep.subr.mxu0 0.0
        %1154 = vmatpush1.msra.mxu0 0.0
        %1155 = vmatprep.subr.mxu0 0.0
        %1156 = vmatpush1.msra.mxu0 0.0
        %1157 = vmatprep.subr.mxu0 0.0
        %1158 = vmatpush1.msra.mxu0 0.0
        %1159 = vmatprep.subr.mxu0 0.0
        %1160 = vmatpush1.msra.mxu0 0.0
        %1161 = vmatprep.subr.mxu0 0.0
        %1162 = vmatpush1.msra.mxu0 0.0
        %1163 = vmatprep.subr.mxu0 0.0
        %1164 = vmatpush1.msra.mxu0 0.0
        %1165 = vmatprep.subr.mxu0 0.0
        %1166 = vmatpush1.msra.mxu0 0.0
        %1167 = vmatprep.mubr.f32.mxu0 0.0
        %v1168 = vand.u32 %v935, 4294901760
        %1169 = vmatmul.mubr.f32.gmra.mrb[0].mxu0 %v1168
        %v1170 = vpop.f32.mrb[0].mxu0
        %v1171 = vadd.f32 %v1026, %v1170
        %v1172 = vpop.f32.mrb[0].mxu0
        %v1173 = vadd.f32 %v1028, %v1172
        %1174 = vmatprep.mubr.f32.mxu0 0.0
        %v1175 = vand.u32 %v938, 4294901760
        %1176 = vmatmul.mubr.f32.gmra.mrb[0].mxu0 %v1175
        %v1177 = vpop.f32.mrb[0].mxu0
        %v1178 = vadd.f32 %v1037, %v1177
        %v1179 = vpop.f32.mrb[0].mxu0
        %v1180 = vadd.f32 %v1039, %v1179
        %1181 = vmatprep.mubr.f32.mxu0 0.0
        %v1182 = vand.u32 %v941, 4294901760
        %1183 = vmatmul.mubr.f32.gmra.mrb[0].mxu0 %v1182
        %v1184 = vpop.f32.mrb[0].mxu0
        %v1185 = vadd.f32 %v1048, %v1184
        %v1186 = vpop.f32.mrb[0].mxu0
        %v1187 = vadd.f32 %v1050, %v1186
        %1188 = vmatprep.mubr.f32.mxu0 0.0
        %v1189 = vand.u32 %v944, 4294901760
        %1190 = vmatmul.mubr.f32.gmra.mrb[0].mxu0 %v1189
        %v1191 = vpop.f32.mrb[0].mxu0
        %v1192 = vadd.f32 %v1059, %v1191
        %v1193 = vpop.f32.mrb[0].mxu0
        %v1194 = vadd.f32 %v1061, %v1193
        %1195 = vdwg.mxu0
        %v1196 = vand.u32 %v164, 4294901760
        %v1197 = vsub.f32 %v164, %v1196
        %1198 = vmatprep.subr.mxu0 %v1197
        %v1199 = vand.u32 %v163, 4294901760
        %v1200 = vsub.f32 %v163, %v1199
        %1201 = vmatpush1.msra.mxu0 %v1200
        %v1202 = vand.u32 %v166, 4294901760
        %v1203 = vsub.f32 %v166, %v1202
        %1204 = vmatprep.subr.mxu0 %v1203
        %v1205 = vand.u32 %v165, 4294901760
        %v1206 = vsub.f32 %v165, %v1205
        %1207 = vmatpush1.msra.mxu0 %v1206
        %v1208 = vand.u32 %v168, 4294901760
        %v1209 = vsub.f32 %v168, %v1208
        %1210 = vmatprep.subr.mxu0 %v1209
        %v1211 = vand.u32 %v167, 4294901760
        %v1212 = vsub.f32 %v167, %v1211
        %1213 = vmatpush1.msra.mxu0 %v1212
        %v1214 = vand.u32 %v170, 4294901760
        %v1215 = vsub.f32 %v170, %v1214
        %1216 = vmatprep.subr.mxu0 %v1215
        %v1217 = vand.u32 %v169, 4294901760
        %v1218 = vsub.f32 %v169, %v1217
        %1219 = vmatpush1.msra.mxu0 %v1218
        %1220 = vmatprep.subr.mxu0 0.0
        %1221 = vmatpush1.msra.mxu0 0.0
        %1222 = vmatprep.subr.mxu0 0.0
        %1223 = vmatpush1.msra.mxu0 0.0
        %1224 = vmatprep.subr.mxu0 0.0
        %1225 = vmatpush1.msra.mxu0 0.0
        %1226 = vmatprep.subr.mxu0 0.0
        %1227 = vmatpush1.msra.mxu0 0.0
        %1228 = vmatprep.subr.mxu0 0.0
        %1229 = vmatpush1.msra.mxu0 0.0
        %1230 = vmatprep.subr.mxu0 0.0
        %1231 = vmatpush1.msra.mxu0 0.0
        %1232 = vmatprep.subr.mxu0 0.0
        %1233 = vmatpush1.msra.mxu0 0.0
        %1234 = vmatprep.subr.mxu0 0.0
        %1235 = vmatpush1.msra.mxu0 0.0
        %1236 = vmatprep.subr.mxu0 0.0
        %1237 = vmatpush1.msra.mxu0 0.0
        %1238 = vmatprep.subr.mxu0 0.0
        %1239 = vmatpush1.msra.mxu0 0.0
        %1240 = vmatprep.subr.mxu0 0.0
        %1241 = vmatpush1.msra.mxu0 0.0
        %1242 = vmatprep.subr.mxu0 0.0
        %1243 = vmatpush1.msra.mxu0 0.0
        %1244 = vmatprep.subr.mxu0 0.0
        %1245 = vmatpush1.msra.mxu0 0.0
        %1246 = vmatprep.subr.mxu0 0.0
        %1247 = vmatpush1.msra.mxu0 0.0
        %1248 = vmatprep.subr.mxu0 0.0
        %1249 = vmatpush1.msra.mxu0 0.0
        %1250 = vmatprep.subr.mxu0 0.0
        %1251 = vmatpush1.msra.mxu0 0.0
        %1252 = vmatprep.subr.mxu0 0.0
        %1253 = vmatpush1.msra.mxu0 0.0
        %1254 = vmatprep.subr.mxu0 0.0
        %1255 = vmatpush1.msra.mxu0 0.0
        %1256 = vmatprep.subr.mxu0 0.0
        %1257 = vmatpush1.msra.mxu0 0.0
        %1258 = vmatprep.subr.mxu0 0.0
        %1259 = vmatpush1.msra.mxu0 0.0
        %1260 = vmatprep.subr.mxu0 0.0
        %1261 = vmatpush1.msra.mxu0 0.0
        %1262 = vmatprep.subr.mxu0 0.0
        %1263 = vmatpush1.msra.mxu0 0.0
        %1264 = vmatprep.subr.mxu0 0.0
        %1265 = vmatpush1.msra.mxu0 0.0
        %1266 = vmatprep.subr.mxu0 0.0
        %1267 = vmatpush1.msra.mxu0 0.0
        %1268 = vmatprep.subr.mxu0 0.0
        %1269 = vmatpush1.msra.mxu0 0.0
        %1270 = vmatprep.subr.mxu0 0.0
        %1271 = vmatpush1.msra.mxu0 0.0
        %1272 = vmatprep.subr.mxu0 0.0
        %1273 = vmatpush1.msra.mxu0 0.0
        %1274 = vmatprep.subr.mxu0 0.0
        %1275 = vmatpush1.msra.mxu0 0.0
        %1276 = vmatprep.mubr.f32.mxu0 0.0
        %v1277 = vand.u32 %v935, 4294901760
        %v1278 = vsub.f32 %v935, %v1277
        %1279 = vmatmul.mubr.f32.gmra.mrb[0].mxu0 %v1278
        %v1280 = vpop.f32.mrb[0].mxu0
        %v1281 = vadd.f32 %v1171, %v1280
        %v1282 = vpop.f32.mrb[0].mxu0
        %v1283 = vadd.f32 %v1173, %v1282
        %1284 = vmatprep.mubr.f32.mxu0 0.0
        %v1285 = vand.u32 %v938, 4294901760
        %v1286 = vsub.f32 %v938, %v1285
        %1287 = vmatmul.mubr.f32.gmra.mrb[0].mxu0 %v1286
        %v1288 = vpop.f32.mrb[0].mxu0
        %v1289 = vadd.f32 %v1178, %v1288
        %v1290 = vpop.f32.mrb[0].mxu0
        %v1291 = vadd.f32 %v1180, %v1290
        %1292 = vmatprep.mubr.f32.mxu0 0.0
        %v1293 = vand.u32 %v941, 4294901760
        %v1294 = vsub.f32 %v941, %v1293
        %1295 = vmatmul.mubr.f32.gmra.mrb[0].mxu0 %v1294
        %v1296 = vpop.f32.mrb[0].mxu0
        %v1297 = vadd.f32 %v1185, %v1296
        %v1298 = vpop.f32.mrb[0].mxu0
        %v1299 = vadd.f32 %v1187, %v1298
        %1300 = vmatprep.mubr.f32.mxu0 0.0
        %v1301 = vand.u32 %v944, 4294901760
        %v1302 = vsub.f32 %v944, %v1301
        %1303 = vmatmul.mubr.f32.gmra.mrb[0].mxu0 %v1302
        %v1304 = vpop.f32.mrb[0].mxu0
        %v1305 = vadd.f32 %v1192, %v1304
        %v1306 = vpop.f32.mrb[0].mxu0
        %v1307 = vadd.f32 %v1194, %v1306
        %1308 = vdwg.mxu0
        %v1309 = vand.u32 %v164, 4294901760
        %1310 = vmatprep.subr.mxu0 %v1309
        %v1311 = vand.u32 %v163, 4294901760
        %1312 = vmatpush1.msra.mxu0 %v1311
        %v1313 = vand.u32 %v166, 4294901760
        %1314 = vmatprep.subr.mxu0 %v1313
        %v1315 = vand.u32 %v165, 4294901760
        %1316 = vmatpush1.msra.mxu0 %v1315
        %v1317 = vand.u32 %v168, 4294901760
        %1318 = vmatprep.subr.mxu0 %v1317
        %v1319 = vand.u32 %v167, 4294901760
        %1320 = vmatpush1.msra.mxu0 %v1319
        %v1321 = vand.u32 %v170, 4294901760
        %1322 = vmatprep.subr.mxu0 %v1321
        %v1323 = vand.u32 %v169, 4294901760
        %1324 = vmatpush1.msra.mxu0 %v1323
        %1325 = vmatprep.subr.mxu0 0.0
        %1326 = vmatpush1.msra.mxu0 0.0
        %1327 = vmatprep.subr.mxu0 0.0
        %1328 = vmatpush1.msra.mxu0 0.0
        %1329 = vmatprep.subr.mxu0 0.0
        %1330 = vmatpush1.msra.mxu0 0.0
        %1331 = vmatprep.subr.mxu0 0.0
        %1332 = vmatpush1.msra.mxu0 0.0
        %1333 = vmatprep.subr.mxu0 0.0
        %1334 = vmatpush1.msra.mxu0 0.0
        %1335 = vmatprep.subr.mxu0 0.0
        %1336 = vmatpush1.msra.mxu0 0.0
        %1337 = vmatprep.subr.mxu0 0.0
        %1338 = vmatpush1.msra.mxu0 0.0
        %1339 = vmatprep.subr.mxu0 0.0
        %1340 = vmatpush1.msra.mxu0 0.0
        %1341 = vmatprep.subr.mxu0 0.0
        %1342 = vmatpush1.msra.mxu0 0.0
        %1343 = vmatprep.subr.mxu0 0.0
        %1344 = vmatpush1.msra.mxu0 0.0
        %1345 = vmatprep.subr.mxu0 0.0
        %1346 = vmatpush1.msra.mxu0 0.0
        %1347 = vmatprep.subr.mxu0 0.0
        %1348 = vmatpush1.msra.mxu0 0.0
        %1349 = vmatprep.subr.mxu0 0.0
        %1350 = vmatpush1.msra.mxu0 0.0
        %1351 = vmatprep.subr.mxu0 0.0
        %1352 = vmatpush1.msra.mxu0 0.0
        %1353 = vmatprep.subr.mxu0 0.0
        %1354 = vmatpush1.msra.mxu0 0.0
        %1355 = vmatprep.subr.mxu0 0.0
        %1356 = vmatpush1.msra.mxu0 0.0
        %1357 = vmatprep.subr.mxu0 0.0
        %1358 = vmatpush1.msra.mxu0 0.0
        %1359 = vmatprep.subr.mxu0 0.0
        %1360 = vmatpush1.msra.mxu0 0.0
        %1361 = vmatprep.subr.mxu0 0.0
        %1362 = vmatpush1.msra.mxu0 0.0
        %1363 = vmatprep.subr.mxu0 0.0
        %1364 = vmatpush1.msra.mxu0 0.0
        %1365 = vmatprep.subr.mxu0 0.0
        %1366 = vmatpush1.msra.mxu0 0.0
        %1367 = vmatprep.subr.mxu0 0.0
        %1368 = vmatpush1.msra.mxu0 0.0
        %1369 = vmatprep.subr.mxu0 0.0
        %1370 = vmatpush1.msra.mxu0 0.0
        %1371 = vmatprep.subr.mxu0 0.0
        %1372 = vmatpush1.msra.mxu0 0.0
        %1373 = vmatprep.subr.mxu0 0.0
        %1374 = vmatpush1.msra.mxu0 0.0
        %1375 = vmatprep.subr.mxu0 0.0
        %1376 = vmatpush1.msra.mxu0 0.0
        %1377 = vmatprep.subr.mxu0 0.0
        %1378 = vmatpush1.msra.mxu0 0.0
        %1379 = vmatprep.subr.mxu0 0.0
        %1380 = vmatpush1.msra.mxu0 0.0
        %1381 = vmatprep.mubr.f32.mxu0 0.0
        %v1382 = vand.u32 %v935, 4294901760
        %v1383 = vsub.f32 %v935, %v1382
        %v1384 = vand.u32 %v1383, 4294901760
        %1385 = vmatmul.mubr.f32.gmra.mrb[0].mxu0 %v1384
        %v1386 = vpop.f32.mrb[0].mxu0
        %v1387 = vadd.f32 %v1281, %v1386
        %v1388 = vpop.f32.mrb[0].mxu0
        %v1389 = vadd.f32 %v1283, %v1388
        %1390 = vmatprep.mubr.f32.mxu0 0.0
        %v1391 = vand.u32 %v938, 4294901760
        %v1392 = vsub.f32 %v938, %v1391
        %v1393 = vand.u32 %v1392, 4294901760
        %1394 = vmatmul.mubr.f32.gmra.mrb[0].mxu0 %v1393
        %v1395 = vpop.f32.mrb[0].mxu0
        %v1396 = vadd.f32 %v1289, %v1395
        %v1397 = vpop.f32.mrb[0].mxu0
        %v1398 = vadd.f32 %v1291, %v1397
        %1399 = vmatprep.mubr.f32.mxu0 0.0
        %v1400 = vand.u32 %v941, 4294901760
        %v1401 = vsub.f32 %v941, %v1400
        %v1402 = vand.u32 %v1401, 4294901760
        %1403 = vmatmul.mubr.f32.gmra.mrb[0].mxu0 %v1402
        %v1404 = vpop.f32.mrb[0].mxu0
        %v1405 = vadd.f32 %v1297, %v1404
        %v1406 = vpop.f32.mrb[0].mxu0
        %v1407 = vadd.f32 %v1299, %v1406
        %1408 = vmatprep.mubr.f32.mxu0 0.0
        %v1409 = vand.u32 %v944, 4294901760
        %v1410 = vsub.f32 %v944, %v1409
        %v1411 = vand.u32 %v1410, 4294901760
        %1412 = vmatmul.mubr.f32.gmra.mrb[0].mxu0 %v1411
        %v1413 = vpop.f32.mrb[0].mxu0
        %v1414 = vadd.f32 %v1305, %v1413
        %v1415 = vpop.f32.mrb[0].mxu0
        %v1416 = vadd.f32 %v1307, %v1415
        %1417 = vdwg.mxu0
        %v1418 = vand.u32 %v164, 4294901760
        %v1419 = vsub.f32 %v164, %v1418
        %v1420 = vand.u32 %v1419, 4294901760
        %1421 = vmatprep.subr.mxu0 %v1420
        %v1422 = vand.u32 %v163, 4294901760
        %v1423 = vsub.f32 %v163, %v1422
        %v1424 = vand.u32 %v1423, 4294901760
        %1425 = vmatpush1.msra.mxu0 %v1424
        %v1426 = vand.u32 %v166, 4294901760
        %v1427 = vsub.f32 %v166, %v1426
        %v1428 = vand.u32 %v1427, 4294901760
        %1429 = vmatprep.subr.mxu0 %v1428
        %v1430 = vand.u32 %v165, 4294901760
        %v1431 = vsub.f32 %v165, %v1430
        %v1432 = vand.u32 %v1431, 4294901760
        %1433 = vmatpush1.msra.mxu0 %v1432
        %v1434 = vand.u32 %v168, 4294901760
        %v1435 = vsub.f32 %v168, %v1434
        %v1436 = vand.u32 %v1435, 4294901760
        %1437 = vmatprep.subr.mxu0 %v1436
        %v1438 = vand.u32 %v167, 4294901760
        %v1439 = vsub.f32 %v167, %v1438
        %v1440 = vand.u32 %v1439, 4294901760
        %1441 = vmatpush1.msra.mxu0 %v1440
        %v1442 = vand.u32 %v170, 4294901760
        %v1443 = vsub.f32 %v170, %v1442
        %v1444 = vand.u32 %v1443, 4294901760
        %1445 = vmatprep.subr.mxu0 %v1444
        %v1446 = vand.u32 %v169, 4294901760
        %v1447 = vsub.f32 %v169, %v1446
        %v1448 = vand.u32 %v1447, 4294901760
        %1449 = vmatpush1.msra.mxu0 %v1448
        %1450 = vmatprep.subr.mxu0 0.0
        %1451 = vmatpush1.msra.mxu0 0.0
        %1452 = vmatprep.subr.mxu0 0.0
        %1453 = vmatpush1.msra.mxu0 0.0
        %1454 = vmatprep.subr.mxu0 0.0
        %1455 = vmatpush1.msra.mxu0 0.0
        %1456 = vmatprep.subr.mxu0 0.0
        %1457 = vmatpush1.msra.mxu0 0.0
        %1458 = vmatprep.subr.mxu0 0.0
        %1459 = vmatpush1.msra.mxu0 0.0
        %1460 = vmatprep.subr.mxu0 0.0
        %1461 = vmatpush1.msra.mxu0 0.0
        %1462 = vmatprep.subr.mxu0 0.0
        %1463 = vmatpush1.msra.mxu0 0.0
        %1464 = vmatprep.subr.mxu0 0.0
        %1465 = vmatpush1.msra.mxu0 0.0
        %1466 = vmatprep.subr.mxu0 0.0
        %1467 = vmatpush1.msra.mxu0 0.0
        %1468 = vmatprep.subr.mxu0 0.0
        %1469 = vmatpush1.msra.mxu0 0.0
        %1470 = vmatprep.subr.mxu0 0.0
        %1471 = vmatpush1.msra.mxu0 0.0
        %1472 = vmatprep.subr.mxu0 0.0
        %1473 = vmatpush1.msra.mxu0 0.0
        %1474 = vmatprep.subr.mxu0 0.0
        %1475 = vmatpush1.msra.mxu0 0.0
        %1476 = vmatprep.subr.mxu0 0.0
        %1477 = vmatpush1.msra.mxu0 0.0
        %1478 = vmatprep.subr.mxu0 0.0
        %1479 = vmatpush1.msra.mxu0 0.0
        %1480 = vmatprep.subr.mxu0 0.0
        %1481 = vmatpush1.msra.mxu0 0.0
        %1482 = vmatprep.subr.mxu0 0.0
        %1483 = vmatpush1.msra.mxu0 0.0
        %1484 = vmatprep.subr.mxu0 0.0
        %1485 = vmatpush1.msra.mxu0 0.0
        %1486 = vmatprep.subr.mxu0 0.0
        %1487 = vmatpush1.msra.mxu0 0.0
        %1488 = vmatprep.subr.mxu0 0.0
        %1489 = vmatpush1.msra.mxu0 0.0
        %1490 = vmatprep.subr.mxu0 0.0
        %1491 = vmatpush1.msra.mxu0 0.0
        %1492 = vmatprep.subr.mxu0 0.0
        %1493 = vmatpush1.msra.mxu0 0.0
        %1494 = vmatprep.subr.mxu0 0.0
        %1495 = vmatpush1.msra.mxu0 0.0
        %1496 = vmatprep.subr.mxu0 0.0
        %1497 = vmatpush1.msra.mxu0 0.0
        %1498 = vmatprep.subr.mxu0 0.0
        %1499 = vmatpush1.msra.mxu0 0.0
        %1500 = vmatprep.subr.mxu0 0.0
        %1501 = vmatpush1.msra.mxu0 0.0
        %1502 = vmatprep.subr.mxu0 0.0
        %1503 = vmatpush1.msra.mxu0 0.0
        %1504 = vmatprep.subr.mxu0 0.0
        %1505 = vmatpush1.msra.mxu0 0.0
        %1506 = vmatprep.mubr.f32.mxu0 0.0
        %v1507 = vand.u32 %v935, 4294901760
        %1508 = vmatmul.mubr.f32.gmra.mrb[0].mxu0 %v1507
        %v1509 = vpop.f32.mrb[0].mxu0
        %v1510 = vadd.f32 %v1387, %v1509
        %v1511 = vpop.f32.mrb[0].mxu0
        %v1512 = vadd.f32 %v1389, %v1511
        %1513 = vmatprep.mubr.f32.mxu0 0.0
        %v1514 = vand.u32 %v938, 4294901760
        %1515 = vmatmul.mubr.f32.gmra.mrb[0].mxu0 %v1514
        %v1516 = vpop.f32.mrb[0].mxu0
        %v1517 = vadd.f32 %v1396, %v1516
        %v1518 = vpop.f32.mrb[0].mxu0
        %v1519 = vadd.f32 %v1398, %v1518
        %1520 = vmatprep.mubr.f32.mxu0 0.0
        %v1521 = vand.u32 %v941, 4294901760
        %1522 = vmatmul.mubr.f32.gmra.mrb[0].mxu0 %v1521
        %v1523 = vpop.f32.mrb[0].mxu0
        %v1524 = vadd.f32 %v1405, %v1523
        %v1525 = vpop.f32.mrb[0].mxu0
        %v1526 = vadd.f32 %v1407, %v1525
        %1527 = vmatprep.mubr.f32.mxu0 0.0
        %v1528 = vand.u32 %v944, 4294901760
        %1529 = vmatmul.mubr.f32.gmra.mrb[0].mxu0 %v1528
        %v1530 = vpop.f32.mrb[0].mxu0
        %v1531 = vadd.f32 %v1414, %v1530
        %v1532 = vpop.f32.mrb[0].mxu0
        %v1533 = vadd.f32 %v1416, %v1532
        %1534 = vdwg.mxu0
        %v1535 = vand.u32 %v164, 4294901760
        %1536 = vmatprep.subr.mxu0 %v1535
        %v1537 = vand.u32 %v163, 4294901760
        %1538 = vmatpush1.msra.mxu0 %v1537
        %v1539 = vand.u32 %v166, 4294901760
        %1540 = vmatprep.subr.mxu0 %v1539
        %v1541 = vand.u32 %v165, 4294901760
        %1542 = vmatpush1.msra.mxu0 %v1541
        %v1543 = vand.u32 %v168, 4294901760
        %1544 = vmatprep.subr.mxu0 %v1543
        %v1545 = vand.u32 %v167, 4294901760
        %1546 = vmatpush1.msra.mxu0 %v1545
        %v1547 = vand.u32 %v170, 4294901760
        %1548 = vmatprep.subr.mxu0 %v1547
        %v1549 = vand.u32 %v169, 4294901760
        %1550 = vmatpush1.msra.mxu0 %v1549
        %1551 = vmatprep.subr.mxu0 0.0
        %1552 = vmatpush1.msra.mxu0 0.0
        %1553 = vmatprep.subr.mxu0 0.0
        %1554 = vmatpush1.msra.mxu0 0.0
        %1555 = vmatprep.subr.mxu0 0.0
        %1556 = vmatpush1.msra.mxu0 0.0
        %1557 = vmatprep.subr.mxu0 0.0
        %1558 = vmatpush1.msra.mxu0 0.0
        %1559 = vmatprep.subr.mxu0 0.0
        %1560 = vmatpush1.msra.mxu0 0.0
        %1561 = vmatprep.subr.mxu0 0.0
        %1562 = vmatpush1.msra.mxu0 0.0
        %1563 = vmatprep.subr.mxu0 0.0
        %1564 = vmatpush1.msra.mxu0 0.0
        %1565 = vmatprep.subr.mxu0 0.0
        %1566 = vmatpush1.msra.mxu0 0.0
        %1567 = vmatprep.subr.mxu0 0.0
        %1568 = vmatpush1.msra.mxu0 0.0
        %1569 = vmatprep.subr.mxu0 0.0
        %1570 = vmatpush1.msra.mxu0 0.0
        %1571 = vmatprep.subr.mxu0 0.0
        %1572 = vmatpush1.msra.mxu0 0.0
        %1573 = vmatprep.subr.mxu0 0.0
        %1574 = vmatpush1.msra.mxu0 0.0
        %1575 = vmatprep.subr.mxu0 0.0
        %1576 = vmatpush1.msra.mxu0 0.0
        %1577 = vmatprep.subr.mxu0 0.0
        %1578 = vmatpush1.msra.mxu0 0.0
        %1579 = vmatprep.subr.mxu0 0.0
        %1580 = vmatpush1.msra.mxu0 0.0
        %1581 = vmatprep.subr.mxu0 0.0
        %1582 = vmatpush1.msra.mxu0 0.0
        %1583 = vmatprep.subr.mxu0 0.0
        %1584 = vmatpush1.msra.mxu0 0.0
        %1585 = vmatprep.subr.mxu0 0.0
        %1586 = vmatpush1.msra.mxu0 0.0
        %1587 = vmatprep.subr.mxu0 0.0
        %1588 = vmatpush1.msra.mxu0 0.0
        %1589 = vmatprep.subr.mxu0 0.0
        %1590 = vmatpush1.msra.mxu0 0.0
        %1591 = vmatprep.subr.mxu0 0.0
        %1592 = vmatpush1.msra.mxu0 0.0
        %1593 = vmatprep.subr.mxu0 0.0
        %1594 = vmatpush1.msra.mxu0 0.0
        %1595 = vmatprep.subr.mxu0 0.0
        %1596 = vmatpush1.msra.mxu0 0.0
        %1597 = vmatprep.subr.mxu0 0.0
        %1598 = vmatpush1.msra.mxu0 0.0
        %1599 = vmatprep.subr.mxu0 0.0
        %1600 = vmatpush1.msra.mxu0 0.0
        %1601 = vmatprep.subr.mxu0 0.0
        %1602 = vmatpush1.msra.mxu0 0.0
        %1603 = vmatprep.subr.mxu0 0.0
        %1604 = vmatpush1.msra.mxu0 0.0
        %1605 = vmatprep.subr.mxu0 0.0
        %1606 = vmatpush1.msra.mxu0 0.0
        %1607 = vmatprep.mubr.f32.mxu0 0.0
        %v1608 = vand.u32 %v935, 4294901760
        %1609 = vmatmul.mubr.f32.gmra.mrb[0].mxu0 %v1608
        %v1610 = vpop.f32.mrb[0].mxu0
        %v1611 = vadd.f32 %v1510, %v1610
        %v1612 = vpop.f32.mrb[0].mxu0
        %v1613 = vadd.f32 %v1512, %v1612
        %1614 = vmatprep.mubr.f32.mxu0 0.0
        %v1615 = vand.u32 %v938, 4294901760
        %1616 = vmatmul.mubr.f32.gmra.mrb[0].mxu0 %v1615
        %v1617 = vpop.f32.mrb[0].mxu0
        %v1618 = vadd.f32 %v1517, %v1617
        %v1619 = vpop.f32.mrb[0].mxu0
        %v1620 = vadd.f32 %v1519, %v1619
        %1621 = vmatprep.mubr.f32.mxu0 0.0
        %v1622 = vand.u32 %v941, 4294901760
        %1623 = vmatmul.mubr.f32.gmra.mrb[0].mxu0 %v1622
        %v1624 = vpop.f32.mrb[0].mxu0
        %v1625 = vadd.f32 %v1524, %v1624
        %v1626 = vpop.f32.mrb[0].mxu0
        %v1627 = vadd.f32 %v1526, %v1626
        %1628 = vmatprep.mubr.f32.mxu0 0.0
        %v1629 = vand.u32 %v944, 4294901760
        %1630 = vmatmul.mubr.f32.gmra.mrb[0].mxu0 %v1629
        %v1631 = vpop.f32.mrb[0].mxu0
        %v1632 = vadd.f32 %v1531, %v1631
        %v1633 = vpop.f32.mrb[0].mxu0
        %v1634 = vadd.f32 %v1533, %v1633
        %1635 = vdwg.mxu0
        %s1636 = sld [smem:[#allocation2]]
        %v1637 = vstv %s1636
        %v1638 = vmul.f32 %v1637, %v1611
        %v1639 = vmul.f32 %v1637, %v1613
        %v1640 = vmul.f32 %v1637, %v1618
        %v1641 = vmul.f32 %v1637, %v1620
        %v1642 = vmul.f32 %v1637, %v1625
        %v1643 = vmul.f32 %v1637, %v1627
        %v1644 = vmul.f32 %v1637, %v1632
        %v1645 = vmul.f32 %v1637, %v1634
        %v1646 = vadd.f32 %v1638, %v163
        %v1647 = vadd.f32 %v1639, %v164
        %v1648 = vadd.f32 %v1640, %v165
        %v1649 = vadd.f32 %v1641, %v166
        %v1650 = vadd.f32 %v1642, %v167
        %v1651 = vadd.f32 %v1643, %v168
        %v1652 = vadd.f32 %v1644, %v169
        %v1653 = vadd.f32 %v1645, %v170
        %1654 = vst [vmem:[%s162] sm:$0xff] %v1646
        %1655 = vst [vmem:[%s162 + $0x8] sm:$0xff] %v1647
        %1656 = vst [vmem:[%s162 + $0x10] sm:$0xff] %v1648
        %1657 = vst [vmem:[%s162 + $0x18] sm:$0xff] %v1649
        %1658 = vst [vmem:[%s162 + $0x20] sm:$0xff] %v1650
        %1659 = vst [vmem:[%s162 + $0x28] sm:$0xff] %v1651
        %1660 = vst [vmem:[%s162 + $0x30] sm:$0xff] %v1652
        %1661 = vst [vmem:[%s162 + $0x38] sm:$0xff] %v1653
        %s1662 = sand.u32 %s75, 1
        %s1663 = scalar_lea.sflag [#allocation5], %s1662
        %s1664 = sand.u32 %s75, 1
        %s1665 = smul.addr %s1664, 64
        %s1666 = scalar_lea.vmem [#allocation6], %s1665
        // Predicated region
        $region33: #{tpu_custom_call.1} parent=27 // pred_check
          %p1667 = pneg %p85
        $region34: #{tpu_custom_call.1} parent=27 // pred_check_branch
          %1669 = sbr.rel (%p1667) target = $region36
        $region35: #{tpu_custom_call.1} parent=27 // pred_region
          %s1671 = ssub.s32 1024, 1024
          %1672 = vsyncadd %s1663, %s1671
          %s1673 = smul.addr %s20, 8
          %s1674 = smul.addr %s1673, 128
          %s1675 = scalar_lea.hbm %s2, %s1674
          %s1676 = sshll.u32 %s1666, 4
          %s1677 = int_to_ptr.vmem [resolvable:$true] %s1676
          %1682 = dma.vmem_to_hbm [thread:$0]  %s1677, 1024, %s1675, %s1663, 256, 256, 16
        $region36: #{tpu_custom_call.1} parent=27 // pred_fallthru
          _
      $region28: #{tpu_custom_call.1} parent=5 // pred_fallthru
        _
      %p1683 = scmp.le.s32.totalorder 2, %s15
      // Predicated region
      $region37: #{tpu_custom_call.1} parent=5 // pred_check
        %p1684 = pneg %p1683
      $region38: #{tpu_custom_call.1} parent=5 // pred_check_branch
        %1686 = sbr.rel (%p1684) target = $region40
      $region39: #{tpu_custom_call.1} parent=5 // pred_region
        %s1687 = ssub.s32 %s15, 2
        // Predicated region
        $region41: #{tpu_custom_call.1} parent=39 // pred_check
          %p1688 = pneg %p91
        $region42: #{tpu_custom_call.1} parent=39 // pred_check_branch
          %1690 = sbr.rel (%p1688) target = $region44
        $region43: #{tpu_custom_call.1} parent=39 // pred_region
          %s1691 = sand.u32 %s76, 1
          %s1692 = scalar_lea.sflag [#allocation5], %s1691
          %s1693 = sand.u32 %s76, 1
          %s1694 = smul.addr %s1693, 64
          %s1695 = scalar_lea.vmem [#allocation6], %s1694
          %1696 = dma.done %s1692, 1024
        $region44: #{tpu_custom_call.1} parent=39 // pred_fallthru
          _
      $region40: #{tpu_custom_call.1} parent=5 // pred_fallthru
        _
    $region6: #{tpu_custom_call.1} parent=1 // loop_footer
      %s19 = sadd.s32 1, %s15
    $region7: #{tpu_custom_call.1} parent=1 // loop_footer_branch
      %14 = sbr.rel target = $region3
    $region8: #{tpu_custom_call.1} parent=1 // loop_exit
      _
    %1697 = vsyncpa [#allocation4], 1
    %s1698 = scalar_lea.sflag [#allocation4], 1
    %1699 = vsyncpa %s1698, 1
    %1700 = vsyncpa [#allocation5], 1
    %s1701 = scalar_lea.sflag [#allocation5], 1
    %1702 = vsyncpa %s1701, 1

</llo_original>
